<compile_context>
chip_gen: v7x
topology: tpu7x:2x2x1
jax: 0.10.0
libtpu: 0.0.40
codegen_flags: <defaults>
</compile_context>

<pallas_src>
import math

import jax
import jax.numpy as jnp
from jax.experimental import pallas as pl
from jax.experimental.pallas import tpu as pltpu

NUM_RES = 2                  # num_residual_blocks
N_LIN = 2 + 2 * NUM_RES      # linear layers per encoder/decoder stack


def _round_up(x, m):
    return (x + m - 1) // m * m


def _vmem_capacity_bytes():
    try:
        return int(pltpu.get_tpu_info().vmem_capacity_bytes)
    except Exception:
        return 64 << 20      # conservative fallback: v7x per-TensorCore VMEM


# ----------------------------- Pallas kernel ---------------------------------

def _make_kernel(hid_pad, lat_pad, in_pad):
    """Builds the fused encoder+decoder kernel for the given padded dims."""

    def _stack(h, w_refs, b_ref, out_dim):
        # h: (TM, d_in_pad) bf16. Weights bf16 (in,out); bias pack f32 (8,pad).
        def lin(v, w_ref, row, n):
            y = jnp.dot(v, w_ref[...], preferred_element_type=jnp.float32)
            return y + b_ref[row:row + 1, :n]          # (1, n) broadcast add

        h = jnp.maximum(lin(h, w_refs[0], 0, hid_pad), 0.0).astype(jnp.bfloat16)
        # TODO(synk): nn.Dropout(p=0.5) is identity here (eval/inference mode).
        for r in range(NUM_RES):
            t = jnp.maximum(lin(h, w_refs[1 + 2 * r], 1 + 2 * r, hid_pad),
                            0.0).astype(jnp.bfloat16)
            t = lin(t, w_refs[2 + 2 * r], 2 + 2 * r, hid_pad)            # f32
            h = (h.astype(jnp.float32) + t).astype(jnp.bfloat16)
        return jnp.maximum(lin(h, w_refs[N_LIN - 1], N_LIN - 1, out_dim),
                           0.0).astype(jnp.bfloat16)

    def kernel(x_ref, *refs):
        enc_w = refs[0:N_LIN]
        enc_b = refs[N_LIN]
        dec_w = refs[N_LIN + 1:2 * N_LIN + 1]
        dec_b = refs[2 * N_LIN + 1]
        enc_out_ref = refs[2 * N_LIN + 2]
        dec_out_ref = refs[2 * N_LIN + 3]

        enc = _stack(x_ref[...], enc_w, enc_b, lat_pad)
        dec = _stack(enc, dec_w, dec_b, in_pad)
        enc_out_ref[...] = enc
        dec_out_ref[...] = dec

    return kernel


# ------------------------------- wrapper --------------------------------------

def eeg_autoencoder_fc(x, enc_w, enc_b, dec_w, dec_b, *,
                       latent_dim, in_features, tm=None):
    """x: (B, in_features) f32. enc_w/dec_w: padded bf16 (in,out) weights.
    enc_b/dec_b: packed (8, pad) f32 bias arrays. Returns f32 (encoded, decoded)."""
    B = x.shape[0]
    in_pad = enc_w[0].shape[0]
    hid_pad = enc_w[1].shape[0]
    lat_pad = enc_w[-1].shape[1]

    # bf16 native tile is (16, 128): round the batch tile to 16. Guarantee at
    # least 2 grid steps so the "parallel" batch axis can shard across v7x's
    # two TensorCores (the extra padded tile is negligible on 1-TC chips).
    b16 = _round_up(B, 16)
    if tm is None:
        tm = min(512, max(16, _round_up(-(-b16 // 2), 16)))
    b_pad = _round_up(max(b16, 2 * tm), tm)

    # Zero-pad batch + feature dims; bf16 input halves the x DMA bytes.
    x_p = jnp.zeros((b_pad, in_pad), jnp.bfloat16)
    x_p = x_p.at[:B, :in_features].set(x.astype(jnp.bfloat16))

    grid = (b_pad // tm,)

    def resident(arr):
        # Whole array VMEM-resident, same block every grid step, and
        # single-buffered: invariant operands don't need the default 2 buffers.
        return pl.BlockSpec(arr.shape, lambda i: (0,) * arr.ndim,
                            pipeline_mode=pl.Buffered(1))

    in_specs = ([pl.BlockSpec((tm, in_pad), lambda i: (i, 0))]
                + [resident(w) for w in enc_w] + [resident(enc_b)]
                + [resident(w) for w in dec_w] + [resident(dec_b)])
    out_specs = (pl.BlockSpec((tm, lat_pad), lambda i: (i, 0)),
                 pl.BlockSpec((tm, in_pad), lambda i: (i, 0)))

    # VMEM budget: single-buffered bf16 weights + f32 bias packs, plus
    # double-buffered bf16 x / encoded / decoded tiles, plus headroom.
    param_bytes = (sum(int(w.size) * 2 for w in list(enc_w) + list(dec_w))
                   + (int(enc_b.size) + int(dec_b.size)) * 4)
    io_bytes = 2 * tm * (in_pad * 2 + lat_pad * 2 + in_pad * 2)
    vmem_cap = _vmem_capacity_bytes()
    vmem_limit = int(min(max(param_bytes + io_bytes + (8 << 20), 32 << 20),
                         int(0.8 * vmem_cap)))

    # Advisory cost estimate: 12 matmuls per padded row + param/IO bytes.
    mm_dims = ([(in_pad, hid_pad)] + [(hid_pad, hid_pad)] * (2 * NUM_RES)
               + [(hid_pad, lat_pad)]
               + [(lat_pad, hid_pad)] + [(hid_pad, hid_pad)] * (2 * NUM_RES)
               + [(hid_pad, in_pad)])
    flops = 2 * b_pad * sum(k * n for k, n in mm_dims)
    bytes_accessed = (param_bytes + b_pad * in_pad * 2
                      + b_pad * (lat_pad + in_pad) * 2)

    # TODO(synk): for tiny-batch serving (B~2-32) the kernel is weight-DMA
    # bound; cross-call VMEM residency of the weights (P10-style futures) or
    # request batching is the real lever and is not implemented here.
    enc_p, dec_p = pl.pallas_call(
        _make_kernel(hid_pad, lat_pad, in_pad),
        grid=grid,
        out_shape=(jax.ShapeDtypeStruct((b_pad, lat_pad), jnp.bfloat16),
                   jax.ShapeDtypeStruct((b_pad, in_pad), jnp.bfloat16)),
        in_specs=in_specs,
        out_specs=out_specs,
        compiler_params=pltpu.CompilerParams(
            dimension_semantics=("parallel",),
            vmem_limit_bytes=vmem_limit),
        cost_estimate=pl.CostEstimate(flops=flops, transcendentals=0,
                                      bytes_accessed=bytes_accessed),
    )(x_p, *enc_w, enc_b, *dec_w, dec_b)

    encoded = enc_p[:B, :latent_dim].astype(jnp.float32)
    decoded = dec_p[:B, :in_features].astype(jnp.float32)
    return encoded, decoded


# ---------------- parameter init (deterministic, PyTorch-like uniform) --------

def _init_linear(key, fan_in, fan_out, in_pad, out_pad):
    k_w, k_b = jax.random.split(key)
    bound = 1.0 / math.sqrt(fan_in)
    w = jax.random.uniform(k_w, (fan_in, fan_out), jnp.float32, -bound, bound)
    b = jax.random.uniform(k_b, (fan_out,), jnp.float32, -bound, bound)
    w_pad = jnp.zeros((in_pad, out_pad), jnp.float32).at[:fan_in, :fan_out].set(w)
    return w, b, w_pad


def init_stack(key, d_in, d_hid, d_out, in_pad, hid_pad, out_pad, bias_pad):
    """Returns (raw_w, raw_b, padded_bf16_w, packed_f32_bias) for one stack."""
    keys = jax.random.split(key, N_LIN)
    dims = [(d_in, d_hid, in_pad, hid_pad)]
    for _ in range(NUM_RES):
        dims += [(d_hid, d_hid, hid_pad, hid_pad),
                 (d_hid, d_hid, hid_pad, hid_pad)]
    dims += [(d_hid, d_out, hid_pad, out_pad)]

    raw_w, raw_b, pad_w = [], [], []
    bias_pack = jnp.zeros((_round_up(N_LIN, 8), bias_pad), jnp.float32)
    for i, (fi, fo, pi, po) in enumerate(dims):
        w, b, wp = _init_linear(keys[i], fi, fo, pi, po)
        raw_w.append(w)
        raw_b.append(b)
        pad_w.append(wp.astype(jnp.bfloat16))
        bias_pack = bias_pack.at[i, :fo].set(b)
    return raw_w, raw_b, pad_w, bias_pack


# ---------------- pure-JAX reference (bf16 matmul inputs, f32 carries) --------

def _ref_stack(h, ws, bs):
    def lin(v, w, b):
        vb = v.astype(jnp.bfloat16).astype(jnp.float32)
        wb = w.astype(jnp.bfloat16).astype(jnp.float32)
        return vb @ wb + b
    h = jnp.maximum(lin(h, ws[0], bs[0]), 0.0)
    for r in range(NUM_RES):
        t = jnp.maximum(lin(h, ws[1 + 2 * r], bs[1 + 2 * r]), 0.0)
        t = lin(t, ws[2 + 2 * r], bs[2 + 2 * r])
        h = h + t
    return jnp.maximum(lin(h, ws[N_LIN - 1], bs[N_LIN - 1]), 0.0)


# ----------------------------------- main --------------------------------------

if __name__ == "__main__":
    # Small shapes consistent with the module's FC forward:
    #   channels=4, time_freq=16 -> in_features=64; hidden=128 (stand-in for
    #   1000), latent_dim=32 (stand-in for 384), batch=2.
    batch = 2
    channels = 4
    time_freq = 16
    in_features = channels * time_freq   # 64
    hidden = 128
    latent_dim = 32

    in_pad = _round_up(in_features, 128)
    hid_pad = _round_up(hidden, 128)
    lat_pad = _round_up(latent_dim, 128)
    bias_pad = max(in_pad, hid_pad, lat_pad)

    key = jax.random.PRNGKey(0)
    k_x, k_enc, k_dec = jax.random.split(key, 3)
    x = jax.random.normal(k_x, (batch, in_features), jnp.float32)

    enc_raw_w, enc_raw_b, enc_w, enc_b = init_stack(
        k_enc, in_features, hidden, latent_dim, in_pad, hid_pad, lat_pad, bias_pad)
    dec_raw_w, dec_raw_b, dec_w, dec_b = init_stack(
        k_dec, latent_dim, hidden, in_features, lat_pad, hid_pad, in_pad, bias_pad)

    encoded, decoded = eeg_autoencoder_fc(
        x, enc_w, enc_b, dec_w, dec_b,
        latent_dim=latent_dim, in_features=in_features)
    encoded, decoded = jax.block_until_ready((encoded, decoded))

    enc_ref = _ref_stack(x, enc_raw_w, enc_raw_b)
    dec_ref = _ref_stack(enc_ref, dec_raw_w, dec_raw_b)

    assert encoded.shape == (batch, latent_dim)
    assert decoded.shape == (batch, in_features)
    assert jnp.allclose(encoded, enc_ref, atol=3e-2, rtol=3e-2), \
        float(jnp.max(jnp.abs(encoded - enc_ref)))
    assert jnp.allclose(decoded, dec_ref, atol=3e-2, rtol=3e-2), \
        float(jnp.max(jnp.abs(decoded - dec_ref)))

    print("KERNEL_OK")
</pallas_src>

<mosaic_0001>
module attributes {stable_mosaic.version = 11 : i64} {
  func.func @kernel(%arg0: i32, %arg1: memref<16x128xbf16, #tpu.memory_space<vmem>>, %arg2: memref<128x128xbf16, #tpu.memory_space<vmem>>, %arg3: memref<128x128xbf16, #tpu.memory_space<vmem>>, %arg4: memref<128x128xbf16, #tpu.memory_space<vmem>>, %arg5: memref<128x128xbf16, #tpu.memory_space<vmem>>, %arg6: memref<128x128xbf16, #tpu.memory_space<vmem>>, %arg7: memref<128x128xbf16, #tpu.memory_space<vmem>>, %arg8: memref<8x128xf32, #tpu.memory_space<vmem>>, %arg9: memref<128x128xbf16, #tpu.memory_space<vmem>>, %arg10: memref<128x128xbf16, #tpu.memory_space<vmem>>, %arg11: memref<128x128xbf16, #tpu.memory_space<vmem>>, %arg12: memref<128x128xbf16, #tpu.memory_space<vmem>>, %arg13: memref<128x128xbf16, #tpu.memory_space<vmem>>, %arg14: memref<128x128xbf16, #tpu.memory_space<vmem>>, %arg15: memref<8x128xf32, #tpu.memory_space<vmem>>, %arg16: memref<16x128xbf16, #tpu.memory_space<vmem>>, %arg17: memref<16x128xbf16, #tpu.memory_space<vmem>>) attributes {dimension_semantics = [#tpu.dimension_semantics<parallel>], iteration_bounds = array<i64: 2>, scalar_prefetch = 0 : i64, scratch_operands = 0 : i64, tpu.core_type = #tpu.core_type<tc>, window_params = [{transform_indices = @transform_0, window_bounds = array<i64: 16, 128>}, {pipeline_mode = #tpu.pipeline_mode<synchronous>, transform_indices = @transform_1, window_bounds = array<i64: 128, 128>}, {pipeline_mode = #tpu.pipeline_mode<synchronous>, transform_indices = @transform_2, window_bounds = array<i64: 128, 128>}, {pipeline_mode = #tpu.pipeline_mode<synchronous>, transform_indices = @transform_3, window_bounds = array<i64: 128, 128>}, {pipeline_mode = #tpu.pipeline_mode<synchronous>, transform_indices = @transform_4, window_bounds = array<i64: 128, 128>}, {pipeline_mode = #tpu.pipeline_mode<synchronous>, transform_indices = @transform_5, window_bounds = array<i64: 128, 128>}, {pipeline_mode = #tpu.pipeline_mode<synchronous>, transform_indices = @transform_6, window_bounds = array<i64: 128, 128>}, {pipeline_mode = #tpu.pipeline_mode<synchronous>, transform_indices = @transform_7, window_bounds = array<i64: 8, 128>}, {pipeline_mode = #tpu.pipeline_mode<synchronous>, transform_indices = @transform_8, window_bounds = array<i64: 128, 128>}, {pipeline_mode = #tpu.pipeline_mode<synchronous>, transform_indices = @transform_9, window_bounds = array<i64: 128, 128>}, {pipeline_mode = #tpu.pipeline_mode<synchronous>, transform_indices = @transform_10, window_bounds = array<i64: 128, 128>}, {pipeline_mode = #tpu.pipeline_mode<synchronous>, transform_indices = @transform_11, window_bounds = array<i64: 128, 128>}, {pipeline_mode = #tpu.pipeline_mode<synchronous>, transform_indices = @transform_12, window_bounds = array<i64: 128, 128>}, {pipeline_mode = #tpu.pipeline_mode<synchronous>, transform_indices = @transform_13, window_bounds = array<i64: 128, 128>}, {pipeline_mode = #tpu.pipeline_mode<synchronous>, transform_indices = @transform_14, window_bounds = array<i64: 8, 128>}, {transform_indices = @transform_15, window_bounds = array<i64: 16, 128>}, {transform_indices = @transform_16, window_bounds = array<i64: 16, 128>}]} {
    %c0 = arith.constant 0 : index
    %c0_0 = arith.constant 0 : index
    %0 = vector.load %arg1[%c0, %c0_0] : memref<16x128xbf16, #tpu.memory_space<vmem>>, vector<16x128xbf16>
    %c0_1 = arith.constant 0 : index
    %c0_2 = arith.constant 0 : index
    %1 = vector.load %arg2[%c0_1, %c0_2] : memref<128x128xbf16, #tpu.memory_space<vmem>>, vector<128x128xbf16>
    %cst = arith.constant dense<0.000000e+00> : vector<16x128xf32>
    %2 = tpu.matmul %0, %1, %cst {dimension_numbers = #tpu.dot_dimension_numbers<[1], [0], [0], [1], [0, 0, 1, 1], [], []>} : vector<16x128xbf16>, vector<128x128xbf16>, vector<16x128xf32> -> vector<16x128xf32>
    %c0_3 = arith.constant 0 : index
    %c0_4 = arith.constant 0 : index
    %3 = vector.load %arg8[%c0_3, %c0_4] : memref<8x128xf32, #tpu.memory_space<vmem>>, vector<1x128xf32>
    %4 = vector.broadcast %3 : vector<1x128xf32> to vector<16x128xf32>
    %5 = arith.addf %2, %4 : vector<16x128xf32>
    %cst_5 = arith.constant 0.000000e+00 : f32
    %6 = vector.broadcast %cst_5 : f32 to vector<16x128xf32>
    %7 = arith.maximumf %5, %6 : vector<16x128xf32>
    %8 = arith.truncf %7 : vector<16x128xf32> to vector<16x128xbf16>
    %c0_6 = arith.constant 0 : index
    %c0_7 = arith.constant 0 : index
    %9 = vector.load %arg3[%c0_6, %c0_7] : memref<128x128xbf16, #tpu.memory_space<vmem>>, vector<128x128xbf16>
    %cst_8 = arith.constant dense<0.000000e+00> : vector<16x128xf32>
    %10 = tpu.matmul %8, %9, %cst_8 {dimension_numbers = #tpu.dot_dimension_numbers<[1], [0], [0], [1], [0, 0, 1, 1], [], []>} : vector<16x128xbf16>, vector<128x128xbf16>, vector<16x128xf32> -> vector<16x128xf32>
    %c1 = arith.constant 1 : index
    %c0_9 = arith.constant 0 : index
    %11 = vector.load %arg8[%c1, %c0_9] : memref<8x128xf32, #tpu.memory_space<vmem>>, vector<1x128xf32>
    %12 = vector.broadcast %11 : vector<1x128xf32> to vector<16x128xf32>
    %13 = arith.addf %10, %12 : vector<16x128xf32>
    %cst_10 = arith.constant 0.000000e+00 : f32
    %14 = vector.broadcast %cst_10 : f32 to vector<16x128xf32>
    %15 = arith.maximumf %13, %14 : vector<16x128xf32>
    %16 = arith.truncf %15 : vector<16x128xf32> to vector<16x128xbf16>
    %c0_11 = arith.constant 0 : index
    %c0_12 = arith.constant 0 : index
    %17 = vector.load %arg4[%c0_11, %c0_12] : memref<128x128xbf16, #tpu.memory_space<vmem>>, vector<128x128xbf16>
    %cst_13 = arith.constant dense<0.000000e+00> : vector<16x128xf32>
    %18 = tpu.matmul %16, %17, %cst_13 {dimension_numbers = #tpu.dot_dimension_numbers<[1], [0], [0], [1], [0, 0, 1, 1], [], []>} : vector<16x128xbf16>, vector<128x128xbf16>, vector<16x128xf32> -> vector<16x128xf32>
    %c2 = arith.constant 2 : index
    %c0_14 = arith.constant 0 : index
    %19 = vector.load %arg8[%c2, %c0_14] : memref<8x128xf32, #tpu.memory_space<vmem>>, vector<1x128xf32>
    %20 = vector.broadcast %19 : vector<1x128xf32> to vector<16x128xf32>
    %21 = arith.addf %18, %20 : vector<16x128xf32>
    %22 = arith.extf %8 : vector<16x128xbf16> to vector<16x128xf32>
    %23 = arith.addf %22, %21 : vector<16x128xf32>
    %24 = arith.truncf %23 : vector<16x128xf32> to vector<16x128xbf16>
    %c0_15 = arith.constant 0 : index
    %c0_16 = arith.constant 0 : index
    %25 = vector.load %arg5[%c0_15, %c0_16] : memref<128x128xbf16, #tpu.memory_space<vmem>>, vector<128x128xbf16>
    %cst_17 = arith.constant dense<0.000000e+00> : vector<16x128xf32>
    %26 = tpu.matmul %24, %25, %cst_17 {dimension_numbers = #tpu.dot_dimension_numbers<[1], [0], [0], [1], [0, 0, 1, 1], [], []>} : vector<16x128xbf16>, vector<128x128xbf16>, vector<16x128xf32> -> vector<16x128xf32>
    %c3 = arith.constant 3 : index
    %c0_18 = arith.constant 0 : index
    %27 = vector.load %arg8[%c3, %c0_18] : memref<8x128xf32, #tpu.memory_space<vmem>>, vector<1x128xf32>
    %28 = vector.broadcast %27 : vector<1x128xf32> to vector<16x128xf32>
    %29 = arith.addf %26, %28 : vector<16x128xf32>
    %cst_19 = arith.constant 0.000000e+00 : f32
    %30 = vector.broadcast %cst_19 : f32 to vector<16x128xf32>
    %31 = arith.maximumf %29, %30 : vector<16x128xf32>
    %32 = arith.truncf %31 : vector<16x128xf32> to vector<16x128xbf16>
    %c0_20 = arith.constant 0 : index
    %c0_21 = arith.constant 0 : index
    %33 = vector.load %arg6[%c0_20, %c0_21] : memref<128x128xbf16, #tpu.memory_space<vmem>>, vector<128x128xbf16>
    %cst_22 = arith.constant dense<0.000000e+00> : vector<16x128xf32>
    %34 = tpu.matmul %32, %33, %cst_22 {dimension_numbers = #tpu.dot_dimension_numbers<[1], [0], [0], [1], [0, 0, 1, 1], [], []>} : vector<16x128xbf16>, vector<128x128xbf16>, vector<16x128xf32> -> vector<16x128xf32>
    %c4 = arith.constant 4 : index
    %c0_23 = arith.constant 0 : index
    %35 = vector.load %arg8[%c4, %c0_23] : memref<8x128xf32, #tpu.memory_space<vmem>>, vector<1x128xf32>
    %36 = vector.broadcast %35 : vector<1x128xf32> to vector<16x128xf32>
    %37 = arith.addf %34, %36 : vector<16x128xf32>
    %38 = arith.extf %24 : vector<16x128xbf16> to vector<16x128xf32>
    %39 = arith.addf %38, %37 : vector<16x128xf32>
    %40 = arith.truncf %39 : vector<16x128xf32> to vector<16x128xbf16>
    %c0_24 = arith.constant 0 : index
    %c0_25 = arith.constant 0 : index
    %41 = vector.load %arg7[%c0_24, %c0_25] : memref<128x128xbf16, #tpu.memory_space<vmem>>, vector<128x128xbf16>
    %cst_26 = arith.constant dense<0.000000e+00> : vector<16x128xf32>
    %42 = tpu.matmul %40, %41, %cst_26 {dimension_numbers = #tpu.dot_dimension_numbers<[1], [0], [0], [1], [0, 0, 1, 1], [], []>} : vector<16x128xbf16>, vector<128x128xbf16>, vector<16x128xf32> -> vector<16x128xf32>
    %c5 = arith.constant 5 : index
    %c0_27 = arith.constant 0 : index
    %43 = vector.load %arg8[%c5, %c0_27] : memref<8x128xf32, #tpu.memory_space<vmem>>, vector<1x128xf32>
    %44 = vector.broadcast %43 : vector<1x128xf32> to vector<16x128xf32>
    %45 = arith.addf %42, %44 : vector<16x128xf32>
    %cst_28 = arith.constant 0.000000e+00 : f32
    %46 = vector.broadcast %cst_28 : f32 to vector<16x128xf32>
    %47 = arith.maximumf %45, %46 : vector<16x128xf32>
    %48 = arith.truncf %47 : vector<16x128xf32> to vector<16x128xbf16>
    %c0_29 = arith.constant 0 : index
    %c0_30 = arith.constant 0 : index
    %49 = vector.load %arg9[%c0_29, %c0_30] : memref<128x128xbf16, #tpu.memory_space<vmem>>, vector<128x128xbf16>
    %cst_31 = arith.constant dense<0.000000e+00> : vector<16x128xf32>
    %50 = tpu.matmul %48, %49, %cst_31 {dimension_numbers = #tpu.dot_dimension_numbers<[1], [0], [0], [1], [0, 0, 1, 1], [], []>} : vector<16x128xbf16>, vector<128x128xbf16>, vector<16x128xf32> -> vector<16x128xf32>
    %c0_32 = arith.constant 0 : index
    %c0_33 = arith.constant 0 : index
    %51 = vector.load %arg15[%c0_32, %c0_33] : memref<8x128xf32, #tpu.memory_space<vmem>>, vector<1x128xf32>
    %52 = vector.broadcast %51 : vector<1x128xf32> to vector<16x128xf32>
    %53 = arith.addf %50, %52 : vector<16x128xf32>
    %cst_34 = arith.constant 0.000000e+00 : f32
    %54 = vector.broadcast %cst_34 : f32 to vector<16x128xf32>
    %55 = arith.maximumf %53, %54 : vector<16x128xf32>
    %56 = arith.truncf %55 : vector<16x128xf32> to vector<16x128xbf16>
    %c0_35 = arith.constant 0 : index
    %c0_36 = arith.constant 0 : index
    %57 = vector.load %arg10[%c0_35, %c0_36] : memref<128x128xbf16, #tpu.memory_space<vmem>>, vector<128x128xbf16>
    %cst_37 = arith.constant dense<0.000000e+00> : vector<16x128xf32>
    %58 = tpu.matmul %56, %57, %cst_37 {dimension_numbers = #tpu.dot_dimension_numbers<[1], [0], [0], [1], [0, 0, 1, 1], [], []>} : vector<16x128xbf16>, vector<128x128xbf16>, vector<16x128xf32> -> vector<16x128xf32>
    %c1_38 = arith.constant 1 : index
    %c0_39 = arith.constant 0 : index
    %59 = vector.load %arg15[%c1_38, %c0_39] : memref<8x128xf32, #tpu.memory_space<vmem>>, vector<1x128xf32>
    %60 = vector.broadcast %59 : vector<1x128xf32> to vector<16x128xf32>
    %61 = arith.addf %58, %60 : vector<16x128xf32>
    %cst_40 = arith.constant 0.000000e+00 : f32
    %62 = vector.broadcast %cst_40 : f32 to vector<16x128xf32>
    %63 = arith.maximumf %61, %62 : vector<16x128xf32>
    %64 = arith.truncf %63 : vector<16x128xf32> to vector<16x128xbf16>
    %c0_41 = arith.constant 0 : index
    %c0_42 = arith.constant 0 : index
    %65 = vector.load %arg11[%c0_41, %c0_42] : memref<128x128xbf16, #tpu.memory_space<vmem>>, vector<128x128xbf16>
    %cst_43 = arith.constant dense<0.000000e+00> : vector<16x128xf32>
    %66 = tpu.matmul %64, %65, %cst_43 {dimension_numbers = #tpu.dot_dimension_numbers<[1], [0], [0], [1], [0, 0, 1, 1], [], []>} : vector<16x128xbf16>, vector<128x128xbf16>, vector<16x128xf32> -> vector<16x128xf32>
    %c2_44 = arith.constant 2 : index
    %c0_45 = arith.constant 0 : index
    %67 = vector.load %arg15[%c2_44, %c0_45] : memref<8x128xf32, #tpu.memory_space<vmem>>, vector<1x128xf32>
    %68 = vector.broadcast %67 : vector<1x128xf32> to vector<16x128xf32>
    %69 = arith.addf %66, %68 : vector<16x128xf32>
    %70 = arith.extf %56 : vector<16x128xbf16> to vector<16x128xf32>
    %71 = arith.addf %70, %69 : vector<16x128xf32>
    %72 = arith.truncf %71 : vector<16x128xf32> to vector<16x128xbf16>
    %c0_46 = arith.constant 0 : index
    %c0_47 = arith.constant 0 : index
    %73 = vector.load %arg12[%c0_46, %c0_47] : memref<128x128xbf16, #tpu.memory_space<vmem>>, vector<128x128xbf16>
    %cst_48 = arith.constant dense<0.000000e+00> : vector<16x128xf32>
    %74 = tpu.matmul %72, %73, %cst_48 {dimension_numbers = #tpu.dot_dimension_numbers<[1], [0], [0], [1], [0, 0, 1, 1], [], []>} : vector<16x128xbf16>, vector<128x128xbf16>, vector<16x128xf32> -> vector<16x128xf32>
    %c3_49 = arith.constant 3 : index
    %c0_50 = arith.constant 0 : index
    %75 = vector.load %arg15[%c3_49, %c0_50] : memref<8x128xf32, #tpu.memory_space<vmem>>, vector<1x128xf32>
    %76 = vector.broadcast %75 : vector<1x128xf32> to vector<16x128xf32>
    %77 = arith.addf %74, %76 : vector<16x128xf32>
    %cst_51 = arith.constant 0.000000e+00 : f32
    %78 = vector.broadcast %cst_51 : f32 to vector<16x128xf32>
    %79 = arith.maximumf %77, %78 : vector<16x128xf32>
    %80 = arith.truncf %79 : vector<16x128xf32> to vector<16x128xbf16>
    %c0_52 = arith.constant 0 : index
    %c0_53 = arith.constant 0 : index
    %81 = vector.load %arg13[%c0_52, %c0_53] : memref<128x128xbf16, #tpu.memory_space<vmem>>, vector<128x128xbf16>
    %cst_54 = arith.constant dense<0.000000e+00> : vector<16x128xf32>
    %82 = tpu.matmul %80, %81, %cst_54 {dimension_numbers = #tpu.dot_dimension_numbers<[1], [0], [0], [1], [0, 0, 1, 1], [], []>} : vector<16x128xbf16>, vector<128x128xbf16>, vector<16x128xf32> -> vector<16x128xf32>
    %c4_55 = arith.constant 4 : index
    %c0_56 = arith.constant 0 : index
    %83 = vector.load %arg15[%c4_55, %c0_56] : memref<8x128xf32, #tpu.memory_space<vmem>>, vector<1x128xf32>
    %84 = vector.broadcast %83 : vector<1x128xf32> to vector<16x128xf32>
    %85 = arith.addf %82, %84 : vector<16x128xf32>
    %86 = arith.extf %72 : vector<16x128xbf16> to vector<16x128xf32>
    %87 = arith.addf %86, %85 : vector<16x128xf32>
    %88 = arith.truncf %87 : vector<16x128xf32> to vector<16x128xbf16>
    %c0_57 = arith.constant 0 : index
    %c0_58 = arith.constant 0 : index
    %89 = vector.load %arg14[%c0_57, %c0_58] : memref<128x128xbf16, #tpu.memory_space<vmem>>, vector<128x128xbf16>
    %cst_59 = arith.constant dense<0.000000e+00> : vector<16x128xf32>
    %90 = tpu.matmul %88, %89, %cst_59 {dimension_numbers = #tpu.dot_dimension_numbers<[1], [0], [0], [1], [0, 0, 1, 1], [], []>} : vector<16x128xbf16>, vector<128x128xbf16>, vector<16x128xf32> -> vector<16x128xf32>
    %c5_60 = arith.constant 5 : index
    %c0_61 = arith.constant 0 : index
    %91 = vector.load %arg15[%c5_60, %c0_61] : memref<8x128xf32, #tpu.memory_space<vmem>>, vector<1x128xf32>
    %92 = vector.broadcast %91 : vector<1x128xf32> to vector<16x128xf32>
    %93 = arith.addf %90, %92 : vector<16x128xf32>
    %cst_62 = arith.constant 0.000000e+00 : f32
    %94 = vector.broadcast %cst_62 : f32 to vector<16x128xf32>
    %95 = arith.maximumf %93, %94 : vector<16x128xf32>
    %96 = arith.truncf %95 : vector<16x128xf32> to vector<16x128xbf16>
    %c0_63 = arith.constant 0 : index
    %c0_64 = arith.constant 0 : index
    %97 = vector.load %arg16[%c0_63, %c0_64] : memref<16x128xbf16, #tpu.memory_space<vmem>>, vector<16x128xbf16>
    tpu.vector_store %arg16[%c0_63, %c0_64], %48 {strides = array<i32>} : memref<16x128xbf16, #tpu.memory_space<vmem>>, vector<16x128xbf16>,
    %c0_65 = arith.constant 0 : index
    %c0_66 = arith.constant 0 : index
    %98 = vector.load %arg17[%c0_65, %c0_66] : memref<16x128xbf16, #tpu.memory_space<vmem>>, vector<16x128xbf16>
    tpu.vector_store %arg17[%c0_65, %c0_66], %96 {strides = array<i32>} : memref<16x128xbf16, #tpu.memory_space<vmem>>, vector<16x128xbf16>,
    return
  }
  func.func @transform_0(%arg0: i32) -> (i32, i32) {
    %c0_i32 = arith.constant 0 : i32
    %c0_i32_0 = arith.constant 0 : i32
    return %arg0, %c0_i32 : i32, i32
  }
  func.func @transform_1(%arg0: i32) -> (i32, i32) {
    %c0_i32 = arith.constant 0 : i32
    %c0_i32_0 = arith.constant 0 : i32
    %c0_i32_1 = arith.constant 0 : i32
    return %c0_i32, %c0_i32_0 : i32, i32
  }
  func.func @transform_2(%arg0: i32) -> (i32, i32) {
    %c0_i32 = arith.constant 0 : i32
    %c0_i32_0 = arith.constant 0 : i32
    %c0_i32_1 = arith.constant 0 : i32
    return %c0_i32, %c0_i32_0 : i32, i32
  }
  func.func @transform_3(%arg0: i32) -> (i32, i32) {
    %c0_i32 = arith.constant 0 : i32
    %c0_i32_0 = arith.constant 0 : i32
    %c0_i32_1 = arith.constant 0 : i32
    return %c0_i32, %c0_i32_0 : i32, i32
  }
  func.func @transform_4(%arg0: i32) -> (i32, i32) {
    %c0_i32 = arith.constant 0 : i32
    %c0_i32_0 = arith.constant 0 : i32
    %c0_i32_1 = arith.constant 0 : i32
    return %c0_i32, %c0_i32_0 : i32, i32
  }
  func.func @transform_5(%arg0: i32) -> (i32, i32) {
    %c0_i32 = arith.constant 0 : i32
    %c0_i32_0 = arith.constant 0 : i32
    %c0_i32_1 = arith.constant 0 : i32
    return %c0_i32, %c0_i32_0 : i32, i32
  }
  func.func @transform_6(%arg0: i32) -> (i32, i32) {
    %c0_i32 = arith.constant 0 : i32
    %c0_i32_0 = arith.constant 0 : i32
    %c0_i32_1 = arith.constant 0 : i32
    return %c0_i32, %c0_i32_0 : i32, i32
  }
  func.func @transform_7(%arg0: i32) -> (i32, i32) {
    %c0_i32 = arith.constant 0 : i32
    %c0_i32_0 = arith.constant 0 : i32
    %c0_i32_1 = arith.constant 0 : i32
    return %c0_i32, %c0_i32_0 : i32, i32
  }
  func.func @transform_8(%arg0: i32) -> (i32, i32) {
    %c0_i32 = arith.constant 0 : i32
    %c0_i32_0 = arith.constant 0 : i32
    %c0_i32_1 = arith.constant 0 : i32
    return %c0_i32, %c0_i32_0 : i32, i32
  }
  func.func @transform_9(%arg0: i32) -> (i32, i32) {
    %c0_i32 = arith.constant 0 : i32
    %c0_i32_0 = arith.constant 0 : i32
    %c0_i32_1 = arith.constant 0 : i32
    return %c0_i32, %c0_i32_0 : i32, i32
  }
  func.func @transform_10(%arg0: i32) -> (i32, i32) {
    %c0_i32 = arith.constant 0 : i32
    %c0_i32_0 = arith.constant 0 : i32
    %c0_i32_1 = arith.constant 0 : i32
    return %c0_i32, %c0_i32_0 : i32, i32
  }
  func.func @transform_11(%arg0: i32) -> (i32, i32) {
    %c0_i32 = arith.constant 0 : i32
    %c0_i32_0 = arith.constant 0 : i32
    %c0_i32_1 = arith.constant 0 : i32
    return %c0_i32, %c0_i32_0 : i32, i32
  }
  func.func @transform_12(%arg0: i32) -> (i32, i32) {
    %c0_i32 = arith.constant 0 : i32
    %c0_i32_0 = arith.constant 0 : i32
    %c0_i32_1 = arith.constant 0 : i32
    return %c0_i32, %c0_i32_0 : i32, i32
  }
  func.func @transform_13(%arg0: i32) -> (i32, i32) {
    %c0_i32 = arith.constant 0 : i32
    %c0_i32_0 = arith.constant 0 : i32
    %c0_i32_1 = arith.constant 0 : i32
    return %c0_i32, %c0_i32_0 : i32, i32
  }
  func.func @transform_14(%arg0: i32) -> (i32, i32) {
    %c0_i32 = arith.constant 0 : i32
    %c0_i32_0 = arith.constant 0 : i32
    %c0_i32_1 = arith.constant 0 : i32
    return %c0_i32, %c0_i32_0 : i32, i32
  }
  func.func @transform_15(%arg0: i32) -> (i32, i32) {
    %c0_i32 = arith.constant 0 : i32
    %c0_i32_0 = arith.constant 0 : i32
    return %arg0, %c0_i32 : i32, i32
  }
  func.func @transform_16(%arg0: i32) -> (i32, i32) {
    %c0_i32 = arith.constant 0 : i32
    %c0_i32_0 = arith.constant 0 : i32
    return %arg0, %c0_i32 : i32, i32
  }
}

</mosaic_0001>

<llo_original>
// kernel: tpu_custom_call.1
$region0: #{tpu_custom_call.1}
  #allocation0 [shape = 'u32[]', space=smem, size = 0x4, offset = 0x4, fixed_abs, tag = 'smem constant byte address 0x4 - core index']
  #allocation1 [shape = 'u32[144,128]{1,0:T(1,128)}', space=vmem, size = 0x12000, scoped, tag = 'internal scratch']
  %s0 = inlined_call_operand.hbm [shape: bf16[32,128], index: 0, kind: input, shape index: {}]
  %s1 = inlined_call_operand.hbm [shape: bf16[128,128], index: 1, kind: input, shape index: {}]
  %s2 = inlined_call_operand.hbm [shape: bf16[128,128], index: 2, kind: input, shape index: {}]
  %s3 = inlined_call_operand.hbm [shape: bf16[128,128], index: 3, kind: input, shape index: {}]
  %s4 = inlined_call_operand.hbm [shape: bf16[128,128], index: 4, kind: input, shape index: {}]
  %s5 = inlined_call_operand.hbm [shape: bf16[128,128], index: 5, kind: input, shape index: {}]
  %s6 = inlined_call_operand.hbm [shape: bf16[128,128], index: 6, kind: input, shape index: {}]
  %s7 = inlined_call_operand.vmem [shape: f32[8,128], index: 7, kind: input, shape index: {}]
  %s8 = inlined_call_operand.hbm [shape: bf16[128,128], index: 8, kind: input, shape index: {}]
  %s9 = inlined_call_operand.hbm [shape: bf16[128,128], index: 9, kind: input, shape index: {}]
  %s10 = inlined_call_operand.hbm [shape: bf16[128,128], index: 10, kind: input, shape index: {}]
  %s11 = inlined_call_operand.hbm [shape: bf16[128,128], index: 11, kind: input, shape index: {}]
  %s12 = inlined_call_operand.hbm [shape: bf16[128,128], index: 12, kind: input, shape index: {}]
  %s13 = inlined_call_operand.hbm [shape: bf16[128,128], index: 13, kind: input, shape index: {}]
  %s14 = inlined_call_operand.vmem [shape: f32[8,128], index: 14, kind: input, shape index: {}]
  %s15 = inlined_call_operand.hbm [shape: bf16[32,128], index: 15, kind: output, shape index: {0}]
  %s16 = inlined_call_operand.hbm [shape: bf16[32,128], index: 16, kind: output, shape index: {1}]
  %17 = xla_tuple %s15, %s16
  %s18 = sld [smem:[#allocation0]]
  $region153: #{tpu_custom_call.1} parent=0
    _
  %s20 = ssub.s32 1, %s18
  %s21 = scalar_select 0, %s20, %s18
  $region1: #{tpu_custom_call.1} parent=0
    #allocation2 [shape = 'u8[8192]{0}', space=vmem, size = 0x2000, scoped, tag = 'input window, operand 0']
    #allocation3 [shape = 's32[2]{0}', space=sflag, size = 0x8, scoped, tag = 'scoped memory for tpu_custom_call.1']
    #allocation4 [shape = 's32[2]{0}', space=sflag, size = 0x8, scoped, tag = 'scoped memory for tpu_custom_call.1']
    #allocation5 [shape = 'u8[32768]{0}', space=vmem, size = 0x8000, scoped, tag = 'input window, operand 1, single buffered']
    #allocation6 [shape = 's32[1]{0}', space=sflag, size = 0x4, scoped, tag = 'scoped memory for tpu_custom_call.1']
    #allocation7 [shape = 'u8[32768]{0}', space=vmem, size = 0x8000, scoped, tag = 'input window, operand 2, single buffered']
    #allocation8 [shape = 'u8[32768]{0}', space=vmem, size = 0x8000, scoped, tag = 'input window, operand 3, single buffered']
    #allocation9 [shape = 's32[1]{0}', space=sflag, size = 0x4, scoped, tag = 'scoped memory for tpu_custom_call.1']
    #allocation10 [shape = 'u8[32768]{0}', space=vmem, size = 0x8000, scoped, tag = 'input window, operand 4, single buffered']
    #allocation11 [shape = 'u8[32768]{0}', space=vmem, size = 0x8000, scoped, tag = 'input window, operand 5, single buffered']
    #allocation12 [shape = 's32[1]{0}', space=sflag, size = 0x4, scoped, tag = 'scoped memory for tpu_custom_call.1']
    #allocation13 [shape = 'u8[32768]{0}', space=vmem, size = 0x8000, scoped, tag = 'input window, operand 6, single buffered']
    #allocation14 [shape = 'u8[32768]{0}', space=vmem, size = 0x8000, scoped, tag = 'input window, operand 8, single buffered']
    #allocation15 [shape = 's32[1]{0}', space=sflag, size = 0x4, scoped, tag = 'scoped memory for tpu_custom_call.1']
    #allocation16 [shape = 'u8[32768]{0}', space=vmem, size = 0x8000, scoped, tag = 'input window, operand 9, single buffered']
    #allocation17 [shape = 'u8[32768]{0}', space=vmem, size = 0x8000, scoped, tag = 'input window, operand 10, single buffered']
    #allocation18 [shape = 's32[1]{0}', space=sflag, size = 0x4, scoped, tag = 'scoped memory for tpu_custom_call.1']
    #allocation19 [shape = 'u8[32768]{0}', space=vmem, size = 0x8000, scoped, tag = 'input window, operand 11, single buffered']
    #allocation20 [shape = 'u8[32768]{0}', space=vmem, size = 0x8000, scoped, tag = 'input window, operand 12, single buffered']
    #allocation21 [shape = 's32[1]{0}', space=sflag, size = 0x4, scoped, tag = 'scoped memory for tpu_custom_call.1']
    #allocation22 [shape = 'u8[32768]{0}', space=vmem, size = 0x8000, scoped, tag = 'input window, operand 13, single buffered']
    #allocation23 [shape = 'u8[8192]{0}', space=vmem, size = 0x2000, scoped, tag = 'output window, operand 0']
    #allocation24 [shape = 'u8[8192]{0}', space=vmem, size = 0x2000, scoped, tag = 'output window, operand 1']
    #allocation25 [shape = 's32[2]{0}', space=sflag, size = 0x8, scoped, tag = 'scoped memory for tpu_custom_call.1']
    %22 = vsyncpa [#allocation3], 0
    %s23 = scalar_lea.sflag [#allocation3], 1
    %24 = vsyncpa %s23, 0
    %25 = vsyncpa [#allocation6], 0
    %26 = vsyncpa [#allocation9], 0
    %27 = vsyncpa [#allocation12], 0
    %28 = vsyncpa [#allocation15], 0
    %29 = vsyncpa [#allocation18], 0
    %30 = vsyncpa [#allocation21], 0
    %31 = vsyncpa [#allocation4], 0
    %s32 = scalar_lea.sflag [#allocation4], 1
    %33 = vsyncpa %s32, 0
    %34 = vsyncpa [#allocation25], 0
    %s35 = scalar_lea.sflag [#allocation25], 1
    %36 = vsyncpa %s35, 0
    loop: start=0, step=1, limit=4
    $region2: #{tpu_custom_call.1} parent=1 // loop_pre_header
      _
    $region3: #{tpu_custom_call.1} parent=1 // loop_header
      %s38 = sphi 0, %s42
      %p39 = scmp.ge.s32.totalorder %s38, 4
      %s48 = sphi 0, %s50
      %s51 = sphi 0, %s48
      %s52 = sphi 0, %s51
      %s68 = sphi 0, %s52
      %s72 = sphi 0, %s72
      %s74 = sphi 0, %s72
      %s75 = sphi 0, %s74
      %s89 = sphi 0, %s75
      %s93 = sphi 0, %s93
      %s95 = sphi 0, %s93
      %s96 = sphi 0, %s95
      %s110 = sphi 0, %s96
      %s114 = sphi 0, %s114
      %s116 = sphi 0, %s114
      %s117 = sphi 0, %s116
      %s131 = sphi 0, %s117
      %s135 = sphi 0, %s135
      %s137 = sphi 0, %s135
      %s138 = sphi 0, %s137
      %s152 = sphi 0, %s138
      %s156 = sphi 0, %s156
      %s158 = sphi 0, %s156
      %s159 = sphi 0, %s158
      %s173 = sphi 0, %s159
      %s177 = sphi 0, %s177
      %s179 = sphi 0, %s177
      %s180 = sphi 0, %s179
      %s194 = sphi 0, %s180
      %s198 = sphi 0, %s198
      %s200 = sphi 0, %s198
      %s201 = sphi 0, %s200
      %s215 = sphi 0, %s201
      %s219 = sphi 0, %s219
      %s221 = sphi 0, %s219
      %s222 = sphi 0, %s221
      %s236 = sphi 0, %s222
      %s240 = sphi 0, %s240
      %s242 = sphi 0, %s240
      %s243 = sphi 0, %s242
      %s257 = sphi 0, %s243
      %s261 = sphi 0, %s261
      %s263 = sphi 0, %s261
      %s264 = sphi 0, %s263
      %s278 = sphi 0, %s264
      %s282 = sphi 0, %s282
      %s284 = sphi 0, %s282
      %s285 = sphi 0, %s284
      %s299 = sphi 0, %s285
      %s303 = sphi 0, %s303
      %s305 = sphi 0, %s303
      %s306 = sphi 0, %s305
      %s320 = sphi 0, %s306
      %s324 = sphi 0, %s324
      %s326 = sphi 0, %s324
      %s327 = sphi 0, %s326
      %s341 = sphi 0, %s327
      %s345 = sphi 0, %s345
      %s347 = sphi 0, %s345
      %s348 = sphi 0, %s347
      %s362 = sphi 0, %s348
      %s368 = sphi 0, %s370
      %s371 = sphi 0, %s368
      %s372 = sphi 0, %s371
      %s388 = sphi 0, %s372
      %s394 = sphi 0, %s396
      %s397 = sphi 0, %s394
      %s398 = sphi 0, %s397
      %s414 = sphi 0, %s398
    $region4: #{tpu_custom_call.1} parent=1 // loop_header_branch
      %41 = sbr.rel (%p39) target = $region8
    $region5: #{tpu_custom_call.1} parent=1 // loop_body
      %s43 = ssub.s32 %s38, 1
      %s44 = ssub.s32 %s38, 2
      %s45 = sadd.s32 %s38, 1
      %s46 = ssub.s32 %s38, %s45
      %p47 = scmp.eq.s32.totalorder %s46, 0
      %s49 = sadd.s32 %s48, 1
      %s50 = scalar_select %p47, %s48, %s49
      %p53 = pneg %p47
      %p54 = scmp.eq.s32.totalorder %s38, 1
      %p55 = por %p53, %p54
      %p56 = scmp.ne.s32.totalorder %s48, %s51
      %p57 = scmp.eq.s32.totalorder %s38, 0
      %p58 = por %p56, %p57
      %p59 = scmp.ne.s32.totalorder %s48, %s51
      %p60 = scmp.eq.s32.totalorder %s43, 1
      %p61 = por %p59, %p60
      %p62 = scmp.ne.s32.totalorder %s51, %s52
      %p63 = scmp.eq.s32.totalorder %s43, 0
      %p64 = por %p62, %p63
      %p65 = scmp.ne.s32.totalorder %s51, %s52
      %p66 = scmp.eq.s32.totalorder %s44, 1
      %p67 = por %p65, %p66
      %p69 = scmp.ne.s32.totalorder %s52, %s68
      %p70 = scmp.eq.s32.totalorder %s44, 0
      %p71 = por %p69, %p70
      %s73 = sadd.s32 %s72, 1
      %p76 = scmp.eq.s32.totalorder %s38, 1
      %p77 = scmp.ne.s32.totalorder %s72, %s74
      %p78 = scmp.eq.s32.totalorder %s38, 0
      %p79 = por %p77, %p78
      %p80 = scmp.ne.s32.totalorder %s72, %s74
      %p81 = scmp.eq.s32.totalorder %s43, 1
      %p82 = por %p80, %p81
      %p83 = scmp.ne.s32.totalorder %s74, %s75
      %p84 = scmp.eq.s32.totalorder %s43, 0
      %p85 = por %p83, %p84
      %p86 = scmp.ne.s32.totalorder %s74, %s75
      %p87 = scmp.eq.s32.totalorder %s44, 1
      %p88 = por %p86, %p87
      %p90 = scmp.ne.s32.totalorder %s75, %s89
      %p91 = scmp.eq.s32.totalorder %s44, 0
      %p92 = por %p90, %p91
      %s94 = sadd.s32 %s93, 1
      %p97 = scmp.eq.s32.totalorder %s38, 1
      %p98 = scmp.ne.s32.totalorder %s93, %s95
      %p99 = scmp.eq.s32.totalorder %s38, 0
      %p100 = por %p98, %p99
      %p101 = scmp.ne.s32.totalorder %s93, %s95
      %p102 = scmp.eq.s32.totalorder %s43, 1
      %p103 = por %p101, %p102
      %p104 = scmp.ne.s32.totalorder %s95, %s96
      %p105 = scmp.eq.s32.totalorder %s43, 0
      %p106 = por %p104, %p105
      %p107 = scmp.ne.s32.totalorder %s95, %s96
      %p108 = scmp.eq.s32.totalorder %s44, 1
      %p109 = por %p107, %p108
      %p111 = scmp.ne.s32.totalorder %s96, %s110
      %p112 = scmp.eq.s32.totalorder %s44, 0
      %p113 = por %p111, %p112
      %s115 = sadd.s32 %s114, 1
      %p118 = scmp.eq.s32.totalorder %s38, 1
      %p119 = scmp.ne.s32.totalorder %s114, %s116
      %p120 = scmp.eq.s32.totalorder %s38, 0
      %p121 = por %p119, %p120
      %p122 = scmp.ne.s32.totalorder %s114, %s116
      %p123 = scmp.eq.s32.totalorder %s43, 1
      %p124 = por %p122, %p123
      %p125 = scmp.ne.s32.totalorder %s116, %s117
      %p126 = scmp.eq.s32.totalorder %s43, 0
      %p127 = por %p125, %p126
      %p128 = scmp.ne.s32.totalorder %s116, %s117
      %p129 = scmp.eq.s32.totalorder %s44, 1
      %p130 = por %p128, %p129
      %p132 = scmp.ne.s32.totalorder %s117, %s131
      %p133 = scmp.eq.s32.totalorder %s44, 0
      %p134 = por %p132, %p133
      %s136 = sadd.s32 %s135, 1
      %p139 = scmp.eq.s32.totalorder %s38, 1
      %p140 = scmp.ne.s32.totalorder %s135, %s137
      %p141 = scmp.eq.s32.totalorder %s38, 0
      %p142 = por %p140, %p141
      %p143 = scmp.ne.s32.totalorder %s135, %s137
      %p144 = scmp.eq.s32.totalorder %s43, 1
      %p145 = por %p143, %p144
      %p146 = scmp.ne.s32.totalorder %s137, %s138
      %p147 = scmp.eq.s32.totalorder %s43, 0
      %p148 = por %p146, %p147
      %p149 = scmp.ne.s32.totalorder %s137, %s138
      %p150 = scmp.eq.s32.totalorder %s44, 1
      %p151 = por %p149, %p150
      %p153 = scmp.ne.s32.totalorder %s138, %s152
      %p154 = scmp.eq.s32.totalorder %s44, 0
      %p155 = por %p153, %p154
      %s157 = sadd.s32 %s156, 1
      %p160 = scmp.eq.s32.totalorder %s38, 1
      %p161 = scmp.ne.s32.totalorder %s156, %s158
      %p162 = scmp.eq.s32.totalorder %s38, 0
      %p163 = por %p161, %p162
      %p164 = scmp.ne.s32.totalorder %s156, %s158
      %p165 = scmp.eq.s32.totalorder %s43, 1
      %p166 = por %p164, %p165
      %p167 = scmp.ne.s32.totalorder %s158, %s159
      %p168 = scmp.eq.s32.totalorder %s43, 0
      %p169 = por %p167, %p168
      %p170 = scmp.ne.s32.totalorder %s158, %s159
      %p171 = scmp.eq.s32.totalorder %s44, 1
      %p172 = por %p170, %p171
      %p174 = scmp.ne.s32.totalorder %s159, %s173
      %p175 = scmp.eq.s32.totalorder %s44, 0
      %p176 = por %p174, %p175
      %s178 = sadd.s32 %s177, 1
      %p181 = scmp.eq.s32.totalorder %s38, 1
      %p182 = scmp.ne.s32.totalorder %s177, %s179
      %p183 = scmp.eq.s32.totalorder %s38, 0
      %p184 = por %p182, %p183
      %p185 = scmp.ne.s32.totalorder %s177, %s179
      %p186 = scmp.eq.s32.totalorder %s43, 1
      %p187 = por %p185, %p186
      %p188 = scmp.ne.s32.totalorder %s179, %s180
      %p189 = scmp.eq.s32.totalorder %s43, 0
      %p190 = por %p188, %p189
      %p191 = scmp.ne.s32.totalorder %s179, %s180
      %p192 = scmp.eq.s32.totalorder %s44, 1
      %p193 = por %p191, %p192
      %p195 = scmp.ne.s32.totalorder %s180, %s194
      %p196 = scmp.eq.s32.totalorder %s44, 0
      %p197 = por %p195, %p196
      %s199 = sadd.s32 %s198, 1
      %p202 = scmp.eq.s32.totalorder %s38, 1
      %p203 = scmp.ne.s32.totalorder %s198, %s200
      %p204 = scmp.eq.s32.totalorder %s38, 0
      %p205 = por %p203, %p204
      %p206 = scmp.ne.s32.totalorder %s198, %s200
      %p207 = scmp.eq.s32.totalorder %s43, 1
      %p208 = por %p206, %p207
      %p209 = scmp.ne.s32.totalorder %s200, %s201
      %p210 = scmp.eq.s32.totalorder %s43, 0
      %p211 = por %p209, %p210
      %p212 = scmp.ne.s32.totalorder %s200, %s201
      %p213 = scmp.eq.s32.totalorder %s44, 1
      %p214 = por %p212, %p213
      %p216 = scmp.ne.s32.totalorder %s201, %s215
      %p217 = scmp.eq.s32.totalorder %s44, 0
      %p218 = por %p216, %p217
      %s220 = sadd.s32 %s219, 1
      %p223 = scmp.eq.s32.totalorder %s38, 1
      %p224 = scmp.ne.s32.totalorder %s219, %s221
      %p225 = scmp.eq.s32.totalorder %s38, 0
      %p226 = por %p224, %p225
      %p227 = scmp.ne.s32.totalorder %s219, %s221
      %p228 = scmp.eq.s32.totalorder %s43, 1
      %p229 = por %p227, %p228
      %p230 = scmp.ne.s32.totalorder %s221, %s222
      %p231 = scmp.eq.s32.totalorder %s43, 0
      %p232 = por %p230, %p231
      %p233 = scmp.ne.s32.totalorder %s221, %s222
      %p234 = scmp.eq.s32.totalorder %s44, 1
      %p235 = por %p233, %p234
      %p237 = scmp.ne.s32.totalorder %s222, %s236
      %p238 = scmp.eq.s32.totalorder %s44, 0
      %p239 = por %p237, %p238
      %s241 = sadd.s32 %s240, 1
      %p244 = scmp.eq.s32.totalorder %s38, 1
      %p245 = scmp.ne.s32.totalorder %s240, %s242
      %p246 = scmp.eq.s32.totalorder %s38, 0
      %p247 = por %p245, %p246
      %p248 = scmp.ne.s32.totalorder %s240, %s242
      %p249 = scmp.eq.s32.totalorder %s43, 1
      %p250 = por %p248, %p249
      %p251 = scmp.ne.s32.totalorder %s242, %s243
      %p252 = scmp.eq.s32.totalorder %s43, 0
      %p253 = por %p251, %p252
      %p254 = scmp.ne.s32.totalorder %s242, %s243
      %p255 = scmp.eq.s32.totalorder %s44, 1
      %p256 = por %p254, %p255
      %p258 = scmp.ne.s32.totalorder %s243, %s257
      %p259 = scmp.eq.s32.totalorder %s44, 0
      %p260 = por %p258, %p259
      %s262 = sadd.s32 %s261, 1
      %p265 = scmp.eq.s32.totalorder %s38, 1
      %p266 = scmp.ne.s32.totalorder %s261, %s263
      %p267 = scmp.eq.s32.totalorder %s38, 0
      %p268 = por %p266, %p267
      %p269 = scmp.ne.s32.totalorder %s261, %s263
      %p270 = scmp.eq.s32.totalorder %s43, 1
      %p271 = por %p269, %p270
      %p272 = scmp.ne.s32.totalorder %s263, %s264
      %p273 = scmp.eq.s32.totalorder %s43, 0
      %p274 = por %p272, %p273
      %p275 = scmp.ne.s32.totalorder %s263, %s264
      %p276 = scmp.eq.s32.totalorder %s44, 1
      %p277 = por %p275, %p276
      %p279 = scmp.ne.s32.totalorder %s264, %s278
      %p280 = scmp.eq.s32.totalorder %s44, 0
      %p281 = por %p279, %p280
      %s283 = sadd.s32 %s282, 1
      %p286 = scmp.eq.s32.totalorder %s38, 1
      %p287 = scmp.ne.s32.totalorder %s282, %s284
      %p288 = scmp.eq.s32.totalorder %s38, 0
      %p289 = por %p287, %p288
      %p290 = scmp.ne.s32.totalorder %s282, %s284
      %p291 = scmp.eq.s32.totalorder %s43, 1
      %p292 = por %p290, %p291
      %p293 = scmp.ne.s32.totalorder %s284, %s285
      %p294 = scmp.eq.s32.totalorder %s43, 0
      %p295 = por %p293, %p294
      %p296 = scmp.ne.s32.totalorder %s284, %s285
      %p297 = scmp.eq.s32.totalorder %s44, 1
      %p298 = por %p296, %p297
      %p300 = scmp.ne.s32.totalorder %s285, %s299
      %p301 = scmp.eq.s32.totalorder %s44, 0
      %p302 = por %p300, %p301
      %s304 = sadd.s32 %s303, 1
      %p307 = scmp.eq.s32.totalorder %s38, 1
      %p308 = scmp.ne.s32.totalorder %s303, %s305
      %p309 = scmp.eq.s32.totalorder %s38, 0
      %p310 = por %p308, %p309
      %p311 = scmp.ne.s32.totalorder %s303, %s305
      %p312 = scmp.eq.s32.totalorder %s43, 1
      %p313 = por %p311, %p312
      %p314 = scmp.ne.s32.totalorder %s305, %s306
      %p315 = scmp.eq.s32.totalorder %s43, 0
      %p316 = por %p314, %p315
      %p317 = scmp.ne.s32.totalorder %s305, %s306
      %p318 = scmp.eq.s32.totalorder %s44, 1
      %p319 = por %p317, %p318
      %p321 = scmp.ne.s32.totalorder %s306, %s320
      %p322 = scmp.eq.s32.totalorder %s44, 0
      %p323 = por %p321, %p322
      %s325 = sadd.s32 %s324, 1
      %p328 = scmp.eq.s32.totalorder %s38, 1
      %p329 = scmp.ne.s32.totalorder %s324, %s326
      %p330 = scmp.eq.s32.totalorder %s38, 0
      %p331 = por %p329, %p330
      %p332 = scmp.ne.s32.totalorder %s324, %s326
      %p333 = scmp.eq.s32.totalorder %s43, 1
      %p334 = por %p332, %p333
      %p335 = scmp.ne.s32.totalorder %s326, %s327
      %p336 = scmp.eq.s32.totalorder %s43, 0
      %p337 = por %p335, %p336
      %p338 = scmp.ne.s32.totalorder %s326, %s327
      %p339 = scmp.eq.s32.totalorder %s44, 1
      %p340 = por %p338, %p339
      %p342 = scmp.ne.s32.totalorder %s327, %s341
      %p343 = scmp.eq.s32.totalorder %s44, 0
      %p344 = por %p342, %p343
      %s346 = sadd.s32 %s345, 1
      %p349 = scmp.eq.s32.totalorder %s38, 1
      %p350 = scmp.ne.s32.totalorder %s345, %s347
      %p351 = scmp.eq.s32.totalorder %s38, 0
      %p352 = por %p350, %p351
      %p353 = scmp.ne.s32.totalorder %s345, %s347
      %p354 = scmp.eq.s32.totalorder %s43, 1
      %p355 = por %p353, %p354
      %p356 = scmp.ne.s32.totalorder %s347, %s348
      %p357 = scmp.eq.s32.totalorder %s43, 0
      %p358 = por %p356, %p357
      %p359 = scmp.ne.s32.totalorder %s347, %s348
      %p360 = scmp.eq.s32.totalorder %s44, 1
      %p361 = por %p359, %p360
      %p363 = scmp.ne.s32.totalorder %s348, %s362
      %p364 = scmp.eq.s32.totalorder %s44, 0
      %p365 = por %p363, %p364
      %s366 = ssub.s32 %s38, %s45
      %p367 = scmp.eq.s32.totalorder %s366, 0
      %s369 = sadd.s32 %s368, 1
      %s370 = scalar_select %p367, %s368, %s369
      %p373 = pneg %p367
      %p374 = scmp.eq.s32.totalorder %s38, 1
      %p375 = por %p373, %p374
      %p376 = scmp.ne.s32.totalorder %s368, %s371
      %p377 = scmp.eq.s32.totalorder %s38, 0
      %p378 = por %p376, %p377
      %p379 = scmp.ne.s32.totalorder %s368, %s371
      %p380 = scmp.eq.s32.totalorder %s43, 1
      %p381 = por %p379, %p380
      %p382 = scmp.ne.s32.totalorder %s371, %s372
      %p383 = scmp.eq.s32.totalorder %s43, 0
      %p384 = por %p382, %p383
      %p385 = scmp.ne.s32.totalorder %s371, %s372
      %p386 = scmp.eq.s32.totalorder %s44, 1
      %p387 = por %p385, %p386
      %p389 = scmp.ne.s32.totalorder %s372, %s388
      %p390 = scmp.eq.s32.totalorder %s44, 0
      %p391 = por %p389, %p390
      %s392 = ssub.s32 %s38, %s45
      %p393 = scmp.eq.s32.totalorder %s392, 0
      %s395 = sadd.s32 %s394, 1
      %s396 = scalar_select %p393, %s394, %s395
      %p399 = pneg %p393
      %p400 = scmp.eq.s32.totalorder %s38, 1
      %p401 = por %p399, %p400
      %p402 = scmp.ne.s32.totalorder %s394, %s397
      %p403 = scmp.eq.s32.totalorder %s38, 0
      %p404 = por %p402, %p403
      %p405 = scmp.ne.s32.totalorder %s394, %s397
      %p406 = scmp.eq.s32.totalorder %s43, 1
      %p407 = por %p405, %p406
      %p408 = scmp.ne.s32.totalorder %s397, %s398
      %p409 = scmp.eq.s32.totalorder %s43, 0
      %p410 = por %p408, %p409
      %p411 = scmp.ne.s32.totalorder %s397, %s398
      %p412 = scmp.eq.s32.totalorder %s44, 1
      %p413 = por %p411, %p412
      %p415 = scmp.ne.s32.totalorder %s398, %s414
      %p416 = scmp.eq.s32.totalorder %s44, 0
      %p417 = por %p415, %p416
      %p418 = scmp.le.s32.totalorder 1, %s38
      %p419 = scmp.lt.s32.totalorder %s38, 3
      %p420 = pnand %p418, %p419
      %p421 = pneg %p420
      // Predicated region
      $region9: #{tpu_custom_call.1} parent=5 // pred_check
        _
      $region10: #{tpu_custom_call.1} parent=5 // pred_check_branch
        %423 = sbr.rel (%p420) target = $region12
      $region11: #{tpu_custom_call.1} parent=5 // pred_region
        %s424 = ssub.s32 %s38, 1
        // Predicated region
        $region13: #{tpu_custom_call.1} parent=11 // pred_check
          %p425 = pneg %p85
        $region14: #{tpu_custom_call.1} parent=11 // pred_check_branch
          %427 = sbr.rel (%p425) target = $region16
        $region15: #{tpu_custom_call.1} parent=11 // pred_region
          %s429 = ssub.s32 1024, 1024
          %430 = vsyncadd [#allocation6], %s429
          %s431 = sshll.u32 [#allocation5], 4
          %s432 = int_to_ptr.vmem [resolvable:$true] %s431
          %437 = dma.hbm_to_vmem [thread:$0]  %s1, 1024, %s432, [#allocation6], 64, 64, 4
        $region16: #{tpu_custom_call.1} parent=11 // pred_fallthru
          _
        // Predicated region
        $region17: #{tpu_custom_call.1} parent=11 // pred_check
          %p438 = pneg %p106
        $region18: #{tpu_custom_call.1} parent=11 // pred_check_branch
          %440 = sbr.rel (%p438) target = $region20
        $region19: #{tpu_custom_call.1} parent=11 // pred_region
          %s442 = ssub.s32 1024, 1024
          %443 = vsyncadd [#allocation6], %s442
          %s444 = sshll.u32 [#allocation7], 4
          %s445 = int_to_ptr.vmem [resolvable:$true] %s444
          %450 = dma.hbm_to_vmem [thread:$0]  %s2, 1024, %s445, [#allocation6], 64, 64, 4
        $region20: #{tpu_custom_call.1} parent=11 // pred_fallthru
          _
        // Predicated region
        $region21: #{tpu_custom_call.1} parent=11 // pred_check
          %p451 = pneg %p127
        $region22: #{tpu_custom_call.1} parent=11 // pred_check_branch
          %453 = sbr.rel (%p451) target = $region24
        $region23: #{tpu_custom_call.1} parent=11 // pred_region
          %s455 = ssub.s32 1024, 1024
          %456 = vsyncadd [#allocation9], %s455
          %s457 = sshll.u32 [#allocation8], 4
          %s458 = int_to_ptr.vmem [resolvable:$true] %s457
          %463 = dma.hbm_to_vmem [thread:$0]  %s3, 1024, %s458, [#allocation9], 64, 64, 4
        $region24: #{tpu_custom_call.1} parent=11 // pred_fallthru
          _
        // Predicated region
        $region25: #{tpu_custom_call.1} parent=11 // pred_check
          %p464 = pneg %p148
        $region26: #{tpu_custom_call.1} parent=11 // pred_check_branch
          %466 = sbr.rel (%p464) target = $region28
        $region27: #{tpu_custom_call.1} parent=11 // pred_region
          %s468 = ssub.s32 1024, 1024
          %469 = vsyncadd [#allocation9], %s468
          %s470 = sshll.u32 [#allocation10], 4
          %s471 = int_to_ptr.vmem [resolvable:$true] %s470
          %476 = dma.hbm_to_vmem [thread:$0]  %s4, 1024, %s471, [#allocation9], 64, 64, 4
        $region28: #{tpu_custom_call.1} parent=11 // pred_fallthru
          _
        // Predicated region
        $region29: #{tpu_custom_call.1} parent=11 // pred_check
          %p477 = pneg %p169
        $region30: #{tpu_custom_call.1} parent=11 // pred_check_branch
          %479 = sbr.rel (%p477) target = $region32
        $region31: #{tpu_custom_call.1} parent=11 // pred_region
          %s481 = ssub.s32 1024, 1024
          %482 = vsyncadd [#allocation12], %s481
          %s483 = sshll.u32 [#allocation11], 4
          %s484 = int_to_ptr.vmem [resolvable:$true] %s483
          %489 = dma.hbm_to_vmem [thread:$0]  %s5, 1024, %s484, [#allocation12], 64, 64, 4
        $region32: #{tpu_custom_call.1} parent=11 // pred_fallthru
          _
        // Predicated region
        $region33: #{tpu_custom_call.1} parent=11 // pred_check
          %p490 = pneg %p190
        $region34: #{tpu_custom_call.1} parent=11 // pred_check_branch
          %492 = sbr.rel (%p490) target = $region36
        $region35: #{tpu_custom_call.1} parent=11 // pred_region
          %s494 = ssub.s32 1024, 1024
          %495 = vsyncadd [#allocation12], %s494
          %s496 = sshll.u32 [#allocation13], 4
          %s497 = int_to_ptr.vmem [resolvable:$true] %s496
          %502 = dma.hbm_to_vmem [thread:$0]  %s6, 1024, %s497, [#allocation12], 64, 64, 4
        $region36: #{tpu_custom_call.1} parent=11 // pred_fallthru
          _
        // Predicated region
        $region37: #{tpu_custom_call.1} parent=11 // pred_check
          %p503 = pneg %p211
        $region38: #{tpu_custom_call.1} parent=11 // pred_check_branch
          %505 = sbr.rel (%p503) target = $region40
        $region39: #{tpu_custom_call.1} parent=11 // pred_region
          _
        $region40: #{tpu_custom_call.1} parent=11 // pred_fallthru
          _
        // Predicated region
        $region41: #{tpu_custom_call.1} parent=11 // pred_check
          %p506 = pneg %p232
        $region42: #{tpu_custom_call.1} parent=11 // pred_check_branch
          %508 = sbr.rel (%p506) target = $region44
        $region43: #{tpu_custom_call.1} parent=11 // pred_region
          %s510 = ssub.s32 1024, 1024
          %511 = vsyncadd [#allocation15], %s510
          %s512 = sshll.u32 [#allocation14], 4
          %s513 = int_to_ptr.vmem [resolvable:$true] %s512
          %518 = dma.hbm_to_vmem [thread:$0]  %s8, 1024, %s513, [#allocation15], 64, 64, 4
        $region44: #{tpu_custom_call.1} parent=11 // pred_fallthru
          _
        // Predicated region
        $region45: #{tpu_custom_call.1} parent=11 // pred_check
          %p519 = pneg %p253
        $region46: #{tpu_custom_call.1} parent=11 // pred_check_branch
          %521 = sbr.rel (%p519) target = $region48
        $region47: #{tpu_custom_call.1} parent=11 // pred_region
          %s523 = ssub.s32 1024, 1024
          %524 = vsyncadd [#allocation15], %s523
          %s525 = sshll.u32 [#allocation16], 4
          %s526 = int_to_ptr.vmem [resolvable:$true] %s525
          %531 = dma.hbm_to_vmem [thread:$0]  %s9, 1024, %s526, [#allocation15], 64, 64, 4
        $region48: #{tpu_custom_call.1} parent=11 // pred_fallthru
          _
        // Predicated region
        $region49: #{tpu_custom_call.1} parent=11 // pred_check
          %p532 = pneg %p274
        $region50: #{tpu_custom_call.1} parent=11 // pred_check_branch
          %534 = sbr.rel (%p532) target = $region52
        $region51: #{tpu_custom_call.1} parent=11 // pred_region
          %s536 = ssub.s32 1024, 1024
          %537 = vsyncadd [#allocation18], %s536
          %s538 = sshll.u32 [#allocation17], 4
          %s539 = int_to_ptr.vmem [resolvable:$true] %s538
          %544 = dma.hbm_to_vmem [thread:$0]  %s10, 1024, %s539, [#allocation18], 64, 64, 4
        $region52: #{tpu_custom_call.1} parent=11 // pred_fallthru
          _
        // Predicated region
        $region53: #{tpu_custom_call.1} parent=11 // pred_check
          %p545 = pneg %p295
        $region54: #{tpu_custom_call.1} parent=11 // pred_check_branch
          %547 = sbr.rel (%p545) target = $region56
        $region55: #{tpu_custom_call.1} parent=11 // pred_region
          %s549 = ssub.s32 1024, 1024
          %550 = vsyncadd [#allocation18], %s549
          %s551 = sshll.u32 [#allocation19], 4
          %s552 = int_to_ptr.vmem [resolvable:$true] %s551
          %557 = dma.hbm_to_vmem [thread:$0]  %s11, 1024, %s552, [#allocation18], 64, 64, 4
        $region56: #{tpu_custom_call.1} parent=11 // pred_fallthru
          _
        // Predicated region
        $region57: #{tpu_custom_call.1} parent=11 // pred_check
          %p558 = pneg %p316
        $region58: #{tpu_custom_call.1} parent=11 // pred_check_branch
          %560 = sbr.rel (%p558) target = $region60
        $region59: #{tpu_custom_call.1} parent=11 // pred_region
          %s562 = ssub.s32 1024, 1024
          %563 = vsyncadd [#allocation21], %s562
          %s564 = sshll.u32 [#allocation20], 4
          %s565 = int_to_ptr.vmem [resolvable:$true] %s564
          %570 = dma.hbm_to_vmem [thread:$0]  %s12, 1024, %s565, [#allocation21], 64, 64, 4
        $region60: #{tpu_custom_call.1} parent=11 // pred_fallthru
          _
        // Predicated region
        $region61: #{tpu_custom_call.1} parent=11 // pred_check
          %p571 = pneg %p337
        $region62: #{tpu_custom_call.1} parent=11 // pred_check_branch
          %573 = sbr.rel (%p571) target = $region64
        $region63: #{tpu_custom_call.1} parent=11 // pred_region
          %s575 = ssub.s32 1024, 1024
          %576 = vsyncadd [#allocation21], %s575
          %s577 = sshll.u32 [#allocation22], 4
          %s578 = int_to_ptr.vmem [resolvable:$true] %s577
          %583 = dma.hbm_to_vmem [thread:$0]  %s13, 1024, %s578, [#allocation21], 64, 64, 4
        $region64: #{tpu_custom_call.1} parent=11 // pred_fallthru
          _
        // Predicated region
        $region65: #{tpu_custom_call.1} parent=11 // pred_check
          %p584 = pneg %p358
        $region66: #{tpu_custom_call.1} parent=11 // pred_check_branch
          %586 = sbr.rel (%p584) target = $region68
        $region67: #{tpu_custom_call.1} parent=11 // pred_region
          _
        $region68: #{tpu_custom_call.1} parent=11 // pred_fallthru
          _
      $region12: #{tpu_custom_call.1} parent=5 // pred_fallthru
        _
      %p587 = scmp.lt.s32.totalorder %s38, 2
      // Predicated region
      $region69: #{tpu_custom_call.1} parent=5 // pred_check
        %p588 = pneg %p587
      $region70: #{tpu_custom_call.1} parent=5 // pred_check_branch
        %590 = sbr.rel (%p588) target = $region72
      $region71: #{tpu_custom_call.1} parent=5 // pred_region
        // Predicated region
        $region73: #{tpu_custom_call.1} parent=71 // pred_check
          %p591 = pneg %p58
        $region74: #{tpu_custom_call.1} parent=71 // pred_check_branch
          %593 = sbr.rel (%p591) target = $region76
        $region75: #{tpu_custom_call.1} parent=71 // pred_region
          %s594 = sand.u32 %s48, 1
          %s595 = scalar_lea.sflag [#allocation3], %s594
          %s596 = sand.u32 %s48, 1
          %s597 = smul.addr %s596, 8
          %s598 = scalar_lea.vmem [#allocation2], %s597
          %s599 = smul.u32 2, %s38
          %s601 = ssub.s32 128, 128
          %602 = vsyncadd %s595, %s601
          %s603 = smul.addr %s599, 64
          %s604 = scalar_lea.hbm %s0, %s603
          %s605 = sshll.u32 %s598, 4
          %s606 = int_to_ptr.vmem [resolvable:$true] %s605
          %611 = dma.hbm_to_vmem [thread:$0]  %s604, 128, %s606, %s595, 64, 64, 4
        $region76: #{tpu_custom_call.1} parent=71 // pred_fallthru
          _
      $region72: #{tpu_custom_call.1} parent=5 // pred_fallthru
        _
      %p612 = scmp.le.s32.totalorder 1, %s38
      %p613 = scmp.lt.s32.totalorder %s38, 3
      %p614 = pnand %p612, %p613
      %p615 = pneg %p614
      // Predicated region
      $region77: #{tpu_custom_call.1} parent=5 // pred_check
        _
      $region78: #{tpu_custom_call.1} parent=5 // pred_check_branch
        %617 = sbr.rel (%p614) target = $region80
      $region79: #{tpu_custom_call.1} parent=5 // pred_region
        %s618 = ssub.s32 %s38, 1
        %s619 = sand.u32 %s51, 1
        %s620 = scalar_lea.sflag [#allocation3], %s619
        %s621 = sand.u32 %s51, 1
        %s622 = smul.addr %s621, 8
        %s623 = scalar_lea.vmem [#allocation2], %s622
        // Predicated region
        $region81: #{tpu_custom_call.1} parent=79 // pred_check
          %p624 = pneg %p64
        $region82: #{tpu_custom_call.1} parent=79 // pred_check_branch
          %626 = sbr.rel (%p624) target = $region84
        $region83: #{tpu_custom_call.1} parent=79 // pred_region
          %627 = dma.done %s620, 128
        $region84: #{tpu_custom_call.1} parent=79 // pred_fallthru
          _
        // Predicated region
        $region85: #{tpu_custom_call.1} parent=79 // pred_check
          %p628 = pneg %p85
        $region86: #{tpu_custom_call.1} parent=79 // pred_check_branch
          %630 = sbr.rel (%p628) target = $region88
        $region87: #{tpu_custom_call.1} parent=79 // pred_region
          %631 = dma.done [#allocation6], 1024
        $region88: #{tpu_custom_call.1} parent=79 // pred_fallthru
          _
        // Predicated region
        $region89: #{tpu_custom_call.1} parent=79 // pred_check
          %p632 = pneg %p106
        $region90: #{tpu_custom_call.1} parent=79 // pred_check_branch
          %634 = sbr.rel (%p632) target = $region92
        $region91: #{tpu_custom_call.1} parent=79 // pred_region
          %635 = dma.done [#allocation6], 1024
        $region92: #{tpu_custom_call.1} parent=79 // pred_fallthru
          _
        // Predicated region
        $region93: #{tpu_custom_call.1} parent=79 // pred_check
          %p636 = pneg %p127
        $region94: #{tpu_custom_call.1} parent=79 // pred_check_branch
          %638 = sbr.rel (%p636) target = $region96
        $region95: #{tpu_custom_call.1} parent=79 // pred_region
          %639 = dma.done [#allocation9], 1024
        $region96: #{tpu_custom_call.1} parent=79 // pred_fallthru
          _
        // Predicated region
        $region97: #{tpu_custom_call.1} parent=79 // pred_check
          %p640 = pneg %p148
        $region98: #{tpu_custom_call.1} parent=79 // pred_check_branch
          %642 = sbr.rel (%p640) target = $region100
        $region99: #{tpu_custom_call.1} parent=79 // pred_region
          %643 = dma.done [#allocation9], 1024
        $region100: #{tpu_custom_call.1} parent=79 // pred_fallthru
          _
        // Predicated region
        $region101: #{tpu_custom_call.1} parent=79 // pred_check
          %p644 = pneg %p169
        $region102: #{tpu_custom_call.1} parent=79 // pred_check_branch
          %646 = sbr.rel (%p644) target = $region104
        $region103: #{tpu_custom_call.1} parent=79 // pred_region
          %647 = dma.done [#allocation12], 1024
        $region104: #{tpu_custom_call.1} parent=79 // pred_fallthru
          _
        // Predicated region
        $region105: #{tpu_custom_call.1} parent=79 // pred_check
          %p648 = pneg %p190
        $region106: #{tpu_custom_call.1} parent=79 // pred_check_branch
          %650 = sbr.rel (%p648) target = $region108
        $region107: #{tpu_custom_call.1} parent=79 // pred_region
          %651 = dma.done [#allocation12], 1024
        $region108: #{tpu_custom_call.1} parent=79 // pred_fallthru
          _
        // Predicated region
        $region109: #{tpu_custom_call.1} parent=79 // pred_check
          %p652 = pneg %p232
        $region110: #{tpu_custom_call.1} parent=79 // pred_check_branch
          %654 = sbr.rel (%p652) target = $region112
        $region111: #{tpu_custom_call.1} parent=79 // pred_region
          %655 = dma.done [#allocation15], 1024
        $region112: #{tpu_custom_call.1} parent=79 // pred_fallthru
          _
        // Predicated region
        $region113: #{tpu_custom_call.1} parent=79 // pred_check
          %p656 = pneg %p253
        $region114: #{tpu_custom_call.1} parent=79 // pred_check_branch
          %658 = sbr.rel (%p656) target = $region116
        $region115: #{tpu_custom_call.1} parent=79 // pred_region
          %659 = dma.done [#allocation15], 1024
        $region116: #{tpu_custom_call.1} parent=79 // pred_fallthru
          _
        // Predicated region
        $region117: #{tpu_custom_call.1} parent=79 // pred_check
          %p660 = pneg %p274
        $region118: #{tpu_custom_call.1} parent=79 // pred_check_branch
          %662 = sbr.rel (%p660) target = $region120
        $region119: #{tpu_custom_call.1} parent=79 // pred_region
          %663 = dma.done [#allocation18], 1024
        $region120: #{tpu_custom_call.1} parent=79 // pred_fallthru
          _
        // Predicated region
        $region121: #{tpu_custom_call.1} parent=79 // pred_check
          %p664 = pneg %p295
        $region122: #{tpu_custom_call.1} parent=79 // pred_check_branch
          %666 = sbr.rel (%p664) target = $region124
        $region123: #{tpu_custom_call.1} parent=79 // pred_region
          %667 = dma.done [#allocation18], 1024
        $region124: #{tpu_custom_call.1} parent=79 // pred_fallthru
          _
        // Predicated region
        $region125: #{tpu_custom_call.1} parent=79 // pred_check
          %p668 = pneg %p316
        $region126: #{tpu_custom_call.1} parent=79 // pred_check_branch
          %670 = sbr.rel (%p668) target = $region128
        $region127: #{tpu_custom_call.1} parent=79 // pred_region
          %671 = dma.done [#allocation21], 1024
        $region128: #{tpu_custom_call.1} parent=79 // pred_fallthru
          _
        // Predicated region
        $region129: #{tpu_custom_call.1} parent=79 // pred_check
          %p672 = pneg %p337
        $region130: #{tpu_custom_call.1} parent=79 // pred_check_branch
          %674 = sbr.rel (%p672) target = $region132
        $region131: #{tpu_custom_call.1} parent=79 // pred_region
          %675 = dma.done [#allocation21], 1024
        $region132: #{tpu_custom_call.1} parent=79 // pred_fallthru
          _
        %s676 = sand.u32 %s51, 1
        %s677 = scalar_lea.sflag [#allocation3], %s676
        %s678 = sand.u32 %s51, 1
        %s679 = smul.addr %s678, 8
        %s680 = scalar_lea.vmem [#allocation2], %s679
        %p681 = pneg %p64
        %p682 = pneg %p61
        %p683 = pneg %p85
        %p684 = pneg %p82
        %p685 = pneg %p106
        %p686 = pneg %p103
        %p687 = pneg %p127
        %p688 = pneg %p124
        %p689 = pneg %p148
        %p690 = pneg %p145
        %p691 = pneg %p169
        %p692 = pneg %p166
        %p693 = pneg %p190
        %p694 = pneg %p187
        %p695 = pneg %p211
        %p696 = pneg %p208
        %p697 = pneg %p232
        %p698 = pneg %p229
        %p699 = pneg %p253
        %p700 = pneg %p250
        %p701 = pneg %p274
        %p702 = pneg %p271
        %p703 = pneg %p295
        %p704 = pneg %p292
        %p705 = pneg %p316
        %p706 = pneg %p313
        %p707 = pneg %p337
        %p708 = pneg %p334
        %p709 = pneg %p358
        %p710 = pneg %p355
        %p711 = pneg %p384
        %p712 = pneg %p381
        %s713 = sand.u32 %s371, 1
        %s714 = scalar_lea.sflag [#allocation4], %s713
        %s715 = sand.u32 %s371, 1
        %s716 = smul.addr %s715, 8
        %s717 = scalar_lea.vmem [#allocation23], %s716
        %p718 = pneg %p410
        %p719 = pneg %p407
        %s720 = sand.u32 %s397, 1
        %s721 = scalar_lea.sflag [#allocation25], %s720
        %s722 = sand.u32 %s397, 1
        %s723 = smul.addr %s722, 8
        %s724 = scalar_lea.vmem [#allocation24], %s723
        %s725 = smul.u32 2, %s43
        %s726 = smul.u32 2, %s43
        %s727 = smul.u32 2, %s43
        %v729 = vld [vmem:[%s623] sm:$0xf]
        %v730 = vld [vmem:[%s623 + $0x4] sm:$0xf]
        %v731 = vld [vmem:[#allocation5] sm:$0xf]
        %v732 = vld [vmem:[#allocation5 + $0x4] sm:$0xf]
        %v733 = vld [vmem:[#allocation5 + $0x8] sm:$0xf]
        %v734 = vld [vmem:[#allocation5 + $0xc] sm:$0xf]
        %v735 = vld [vmem:[#allocation5 + $0x10] sm:$0xf]
        %v736 = vld [vmem:[#allocation5 + $0x14] sm:$0xf]
        %v737 = vld [vmem:[#allocation5 + $0x18] sm:$0xf]
        %v738 = vld [vmem:[#allocation5 + $0x1c] sm:$0xf]
        %v739 = vld [vmem:[#allocation5 + $0x20] sm:$0xf]
        %v740 = vld [vmem:[#allocation5 + $0x24] sm:$0xf]
        %v741 = vld [vmem:[#allocation5 + $0x28] sm:$0xf]
        %v742 = vld [vmem:[#allocation5 + $0x2c] sm:$0xf]
        %v743 = vld [vmem:[#allocation5 + $0x30] sm:$0xf]
        %v744 = vld [vmem:[#allocation5 + $0x34] sm:$0xf]
        %v745 = vld [vmem:[#allocation5 + $0x38] sm:$0xf]
        %v746 = vld [vmem:[#allocation5 + $0x3c] sm:$0xf]
        %v747 = vld [vmem:[%s7] sm:$0x1]
        %v748 = vlaneseq
        %v749 = vshrl.u32 %v748, 7
        %v750 = vsub.s32 0, %v749
        %v751 = vrot.slane %v747, %v750
        %v754 = vunpack.c.l.b16 %v729
        %v755 = vunpack.c.l.b16 %v730
        %v756 = vpack.c.b16 %v755, %v754
        %v774 = vunpack.c.l.b16 %v731
        %v775 = vunpack.c.l.b16 %v732
        %v776 = vunpack.c.l.b16 %v733
        %v777 = vunpack.c.l.b16 %v734
        %v778 = vunpack.c.l.b16 %v735
        %v779 = vunpack.c.l.b16 %v736
        %v780 = vunpack.c.l.b16 %v737
        %v781 = vunpack.c.l.b16 %v738
        %v782 = vunpack.c.l.b16 %v739
        %v783 = vunpack.c.l.b16 %v740
        %v784 = vunpack.c.l.b16 %v741
        %v785 = vunpack.c.l.b16 %v742
        %v786 = vunpack.c.l.b16 %v743
        %v787 = vunpack.c.l.b16 %v744
        %v788 = vunpack.c.l.b16 %v745
        %v789 = vunpack.c.l.b16 %v746
        %v790 = vpack.c.b16 %v775, %v774
        %v791 = vpack.c.b16 %v777, %v776
        %v792 = vpack.c.b16 %v779, %v778
        %v793 = vpack.c.b16 %v781, %v780
        %v794 = vpack.c.b16 %v783, %v782
        %v795 = vpack.c.b16 %v785, %v784
        %v796 = vpack.c.b16 %v787, %v786
        %v797 = vpack.c.b16 %v789, %v788
        %806 = vmatprep.subr.bf16.mxu0 0
        %807 = vmatpush1.bf16.msra.mxu0 %v790
        %808 = vmatprep.subr.bf16.mxu0 0
        %809 = vmatpush1.bf16.msra.mxu0 %v791
        %810 = vmatprep.subr.bf16.mxu0 0
        %811 = vmatpush1.bf16.msra.mxu0 %v792
        %812 = vmatprep.subr.bf16.mxu0 0
        %813 = vmatpush1.bf16.msra.mxu0 %v793
        %814 = vmatprep.subr.bf16.mxu0 0
        %815 = vmatpush1.bf16.msra.mxu0 %v794
        %816 = vmatprep.subr.bf16.mxu0 0
        %817 = vmatpush1.bf16.msra.mxu0 %v795
        %818 = vmatprep.subr.bf16.mxu0 0
        %819 = vmatpush1.bf16.msra.mxu0 %v796
        %820 = vmatprep.subr.bf16.mxu0 0
        %821 = vmatpush1.bf16.msra.mxu0 %v797
        %822 = vmatprep.subr.bf16.mxu0 0
        %823 = vmatpush1.bf16.msra.mxu0 0
        %824 = vmatprep.subr.bf16.mxu0 0
        %825 = vmatpush1.bf16.msra.mxu0 0
        %826 = vmatprep.subr.bf16.mxu0 0
        %827 = vmatpush1.bf16.msra.mxu0 0
        %828 = vmatprep.subr.bf16.mxu0 0
        %829 = vmatpush1.bf16.msra.mxu0 0
        %830 = vmatprep.subr.bf16.mxu0 0
        %831 = vmatpush1.bf16.msra.mxu0 0
        %832 = vmatprep.subr.bf16.mxu0 0
        %833 = vmatpush1.bf16.msra.mxu0 0
        %834 = vmatprep.subr.bf16.mxu0 0
        %835 = vmatpush1.bf16.msra.mxu0 0
        %836 = vmatprep.subr.bf16.mxu0 0
        %837 = vmatpush1.bf16.msra.mxu0 0
        %838 = vmatprep.mubr.bf16.mxu0 0
        %839 = vmatmul.mubr.bf16.gmra.mrb[0].mxu0 %v756
        %v840 = vpop.f32.mrb[0].mxu0
        %v841 = vadd.f32 %v751, %v840
        %v842 = vpop.f32.mrb[0].mxu0
        %v843 = vpop.f32.mrb[0].mxu0
        %v844 = vadd.f32 %v751, %v843
        %v845 = vpop.f32.mrb[0].mxu0
        %846 = vdwg.mxu0
        %v847 = vmax.f32 %v841, 0.0
        %v848 = vmax.f32 %v844, 0.0
        %v849 = vpack.c.bf16 %v848, %v847
        %v850 = vld [vmem:[#allocation7] sm:$0xf]
        %v851 = vld [vmem:[#allocation7 + $0x4] sm:$0xf]
        %v852 = vld [vmem:[#allocation7 + $0x8] sm:$0xf]
        %v853 = vld [vmem:[#allocation7 + $0xc] sm:$0xf]
        %v854 = vld [vmem:[#allocation7 + $0x10] sm:$0xf]
        %v855 = vld [vmem:[#allocation7 + $0x14] sm:$0xf]
        %v856 = vld [vmem:[#allocation7 + $0x18] sm:$0xf]
        %v857 = vld [vmem:[#allocation7 + $0x1c] sm:$0xf]
        %v858 = vld [vmem:[#allocation7 + $0x20] sm:$0xf]
        %v859 = vld [vmem:[#allocation7 + $0x24] sm:$0xf]
        %v860 = vld [vmem:[#allocation7 + $0x28] sm:$0xf]
        %v861 = vld [vmem:[#allocation7 + $0x2c] sm:$0xf]
        %v862 = vld [vmem:[#allocation7 + $0x30] sm:$0xf]
        %v863 = vld [vmem:[#allocation7 + $0x34] sm:$0xf]
        %v864 = vld [vmem:[#allocation7 + $0x38] sm:$0xf]
        %v865 = vld [vmem:[#allocation7 + $0x3c] sm:$0xf]
        %v866 = vld [vmem:[%s7 + $0x1] sm:$0x1]
        %v867 = vlaneseq
        %v868 = vshrl.u32 %v867, 7
        %v869 = vsub.s32 0, %v868
        %v870 = vrot.slane %v866, %v869
        %v887 = vunpack.c.l.b16 %v850
        %v888 = vunpack.c.l.b16 %v851
        %v889 = vunpack.c.l.b16 %v852
        %v890 = vunpack.c.l.b16 %v853
        %v891 = vunpack.c.l.b16 %v854
        %v892 = vunpack.c.l.b16 %v855
        %v893 = vunpack.c.l.b16 %v856
        %v894 = vunpack.c.l.b16 %v857
        %v895 = vunpack.c.l.b16 %v858
        %v896 = vunpack.c.l.b16 %v859
        %v897 = vunpack.c.l.b16 %v860
        %v898 = vunpack.c.l.b16 %v861
        %v899 = vunpack.c.l.b16 %v862
        %v900 = vunpack.c.l.b16 %v863
        %v901 = vunpack.c.l.b16 %v864
        %v902 = vunpack.c.l.b16 %v865
        %v903 = vpack.c.b16 %v888, %v887
        %v904 = vpack.c.b16 %v890, %v889
        %v905 = vpack.c.b16 %v892, %v891
        %v906 = vpack.c.b16 %v894, %v893
        %v907 = vpack.c.b16 %v896, %v895
        %v908 = vpack.c.b16 %v898, %v897
        %v909 = vpack.c.b16 %v900, %v899
        %v910 = vpack.c.b16 %v902, %v901
        %919 = vmatprep.subr.bf16.mxu0 0
        %920 = vmatpush1.bf16.msra.mxu0 %v903
        %921 = vmatprep.subr.bf16.mxu0 0
        %922 = vmatpush1.bf16.msra.mxu0 %v904
        %923 = vmatprep.subr.bf16.mxu0 0
        %924 = vmatpush1.bf16.msra.mxu0 %v905
        %925 = vmatprep.subr.bf16.mxu0 0
        %926 = vmatpush1.bf16.msra.mxu0 %v906
        %927 = vmatprep.subr.bf16.mxu0 0
        %928 = vmatpush1.bf16.msra.mxu0 %v907
        %929 = vmatprep.subr.bf16.mxu0 0
        %930 = vmatpush1.bf16.msra.mxu0 %v908
        %931 = vmatprep.subr.bf16.mxu0 0
        %932 = vmatpush1.bf16.msra.mxu0 %v909
        %933 = vmatprep.subr.bf16.mxu0 0
        %934 = vmatpush1.bf16.msra.mxu0 %v910
        %935 = vmatprep.subr.bf16.mxu0 0
        %936 = vmatpush1.bf16.msra.mxu0 0
        %937 = vmatprep.subr.bf16.mxu0 0
        %938 = vmatpush1.bf16.msra.mxu0 0
        %939 = vmatprep.subr.bf16.mxu0 0
        %940 = vmatpush1.bf16.msra.mxu0 0
        %941 = vmatprep.subr.bf16.mxu0 0
        %942 = vmatpush1.bf16.msra.mxu0 0
        %943 = vmatprep.subr.bf16.mxu0 0
        %944 = vmatpush1.bf16.msra.mxu0 0
        %945 = vmatprep.subr.bf16.mxu0 0
        %946 = vmatpush1.bf16.msra.mxu0 0
        %947 = vmatprep.subr.bf16.mxu0 0
        %948 = vmatpush1.bf16.msra.mxu0 0
        %949 = vmatprep.subr.bf16.mxu0 0
        %950 = vmatpush1.bf16.msra.mxu0 0
        %951 = vmatprep.mubr.bf16.mxu0 0
        %952 = vmatmul.mubr.bf16.gmra.mrb[0].mxu0 %v849
        %v953 = vpop.f32.mrb[0].mxu0
        %v954 = vadd.f32 %v870, %v953
        %v955 = vpop.f32.mrb[0].mxu0
        %v956 = vpop.f32.mrb[0].mxu0
        %v957 = vadd.f32 %v870, %v956
        %v958 = vpop.f32.mrb[0].mxu0
        %959 = vdwg.mxu0
        %v960 = vmax.f32 %v954, 0.0
        %v961 = vmax.f32 %v957, 0.0
        %v962 = vpack.c.bf16 %v961, %v960
        %v963 = vld [vmem:[#allocation8] sm:$0xf]
        %v964 = vld [vmem:[#allocation8 + $0x4] sm:$0xf]
        %v965 = vld [vmem:[#allocation8 + $0x8] sm:$0xf]
        %v966 = vld [vmem:[#allocation8 + $0xc] sm:$0xf]
        %v967 = vld [vmem:[#allocation8 + $0x10] sm:$0xf]
        %v968 = vld [vmem:[#allocation8 + $0x14] sm:$0xf]
        %v969 = vld [vmem:[#allocation8 + $0x18] sm:$0xf]
        %v970 = vld [vmem:[#allocation8 + $0x1c] sm:$0xf]
        %v971 = vld [vmem:[#allocation8 + $0x20] sm:$0xf]
        %v972 = vld [vmem:[#allocation8 + $0x24] sm:$0xf]
        %v973 = vld [vmem:[#allocation8 + $0x28] sm:$0xf]
        %v974 = vld [vmem:[#allocation8 + $0x2c] sm:$0xf]
        %v975 = vld [vmem:[#allocation8 + $0x30] sm:$0xf]
        %v976 = vld [vmem:[#allocation8 + $0x34] sm:$0xf]
        %v977 = vld [vmem:[#allocation8 + $0x38] sm:$0xf]
        %v978 = vld [vmem:[#allocation8 + $0x3c] sm:$0xf]
        %v979 = vld [vmem:[%s7 + $0x2] sm:$0x1]
        %v980 = vlaneseq
        %v981 = vshrl.u32 %v980, 7
        %v982 = vsub.s32 0, %v981
        %v983 = vrot.slane %v979, %v982
        %v1000 = vunpack.c.l.b16 %v963
        %v1001 = vunpack.c.l.b16 %v964
        %v1002 = vunpack.c.l.b16 %v965
        %v1003 = vunpack.c.l.b16 %v966
        %v1004 = vunpack.c.l.b16 %v967
        %v1005 = vunpack.c.l.b16 %v968
        %v1006 = vunpack.c.l.b16 %v969
        %v1007 = vunpack.c.l.b16 %v970
        %v1008 = vunpack.c.l.b16 %v971
        %v1009 = vunpack.c.l.b16 %v972
        %v1010 = vunpack.c.l.b16 %v973
        %v1011 = vunpack.c.l.b16 %v974
        %v1012 = vunpack.c.l.b16 %v975
        %v1013 = vunpack.c.l.b16 %v976
        %v1014 = vunpack.c.l.b16 %v977
        %v1015 = vunpack.c.l.b16 %v978
        %v1016 = vpack.c.b16 %v1001, %v1000
        %v1017 = vpack.c.b16 %v1003, %v1002
        %v1018 = vpack.c.b16 %v1005, %v1004
        %v1019 = vpack.c.b16 %v1007, %v1006
        %v1020 = vpack.c.b16 %v1009, %v1008
        %v1021 = vpack.c.b16 %v1011, %v1010
        %v1022 = vpack.c.b16 %v1013, %v1012
        %v1023 = vpack.c.b16 %v1015, %v1014
        %1032 = vmatprep.subr.bf16.mxu0 0
        %1033 = vmatpush1.bf16.msra.mxu0 %v1016
        %1034 = vmatprep.subr.bf16.mxu0 0
        %1035 = vmatpush1.bf16.msra.mxu0 %v1017
        %1036 = vmatprep.subr.bf16.mxu0 0
        %1037 = vmatpush1.bf16.msra.mxu0 %v1018
        %1038 = vmatprep.subr.bf16.mxu0 0
        %1039 = vmatpush1.bf16.msra.mxu0 %v1019
        %1040 = vmatprep.subr.bf16.mxu0 0
        %1041 = vmatpush1.bf16.msra.mxu0 %v1020
        %1042 = vmatprep.subr.bf16.mxu0 0
        %1043 = vmatpush1.bf16.msra.mxu0 %v1021
        %1044 = vmatprep.subr.bf16.mxu0 0
        %1045 = vmatpush1.bf16.msra.mxu0 %v1022
        %1046 = vmatprep.subr.bf16.mxu0 0
        %1047 = vmatpush1.bf16.msra.mxu0 %v1023
        %1048 = vmatprep.subr.bf16.mxu0 0
        %1049 = vmatpush1.bf16.msra.mxu0 0
        %1050 = vmatprep.subr.bf16.mxu0 0
        %1051 = vmatpush1.bf16.msra.mxu0 0
        %1052 = vmatprep.subr.bf16.mxu0 0
        %1053 = vmatpush1.bf16.msra.mxu0 0
        %1054 = vmatprep.subr.bf16.mxu0 0
        %1055 = vmatpush1.bf16.msra.mxu0 0
        %1056 = vmatprep.subr.bf16.mxu0 0
        %1057 = vmatpush1.bf16.msra.mxu0 0
        %1058 = vmatprep.subr.bf16.mxu0 0
        %1059 = vmatpush1.bf16.msra.mxu0 0
        %1060 = vmatprep.subr.bf16.mxu0 0
        %1061 = vmatpush1.bf16.msra.mxu0 0
        %1062 = vmatprep.subr.bf16.mxu0 0
        %1063 = vmatpush1.bf16.msra.mxu0 0
        %1064 = vmatprep.mubr.bf16.mxu0 0
        %1065 = vmatmul.mubr.bf16.gmra.mrb[0].mxu0 %v962
        %v1066 = vpop.f32.mrb[0].mxu0
        %v1067 = vadd.f32 %v983, %v1066
        %v1068 = vpop.f32.mrb[0].mxu0
        %v1069 = vpop.f32.mrb[0].mxu0
        %v1070 = vadd.f32 %v983, %v1069
        %v1071 = vpop.f32.mrb[0].mxu0
        %1072 = vdwg.mxu0
        %v1073 = vunpack.c.l.bf16 %v849
        %v1074 = vunpack.c.h.bf16 %v849
        %v1075 = vadd.f32 %v1073, %v1067
        %v1076 = vadd.f32 %v1074, %v1070
        %v1077 = vpack.c.bf16 %v1076, %v1075
        %v1078 = vld [vmem:[#allocation10] sm:$0xf]
        %v1079 = vld [vmem:[#allocation10 + $0x4] sm:$0xf]
        %v1080 = vld [vmem:[#allocation10 + $0x8] sm:$0xf]
        %v1081 = vld [vmem:[#allocation10 + $0xc] sm:$0xf]
        %v1082 = vld [vmem:[#allocation10 + $0x10] sm:$0xf]
        %v1083 = vld [vmem:[#allocation10 + $0x14] sm:$0xf]
        %v1084 = vld [vmem:[#allocation10 + $0x18] sm:$0xf]
        %v1085 = vld [vmem:[#allocation10 + $0x1c] sm:$0xf]
        %v1086 = vld [vmem:[#allocation10 + $0x20] sm:$0xf]
        %v1087 = vld [vmem:[#allocation10 + $0x24] sm:$0xf]
        %v1088 = vld [vmem:[#allocation10 + $0x28] sm:$0xf]
        %v1089 = vld [vmem:[#allocation10 + $0x2c] sm:$0xf]
        %v1090 = vld [vmem:[#allocation10 + $0x30] sm:$0xf]
        %v1091 = vld [vmem:[#allocation10 + $0x34] sm:$0xf]
        %v1092 = vld [vmem:[#allocation10 + $0x38] sm:$0xf]
        %v1093 = vld [vmem:[#allocation10 + $0x3c] sm:$0xf]
        %v1094 = vld [vmem:[%s7 + $0x3] sm:$0x1]
        %v1095 = vlaneseq
        %v1096 = vshrl.u32 %v1095, 7
        %v1097 = vsub.s32 0, %v1096
        %v1098 = vrot.slane %v1094, %v1097
        %v1115 = vunpack.c.l.b16 %v1078
        %v1116 = vunpack.c.l.b16 %v1079
        %v1117 = vunpack.c.l.b16 %v1080
        %v1118 = vunpack.c.l.b16 %v1081
        %v1119 = vunpack.c.l.b16 %v1082
        %v1120 = vunpack.c.l.b16 %v1083
        %v1121 = vunpack.c.l.b16 %v1084
        %v1122 = vunpack.c.l.b16 %v1085
        %v1123 = vunpack.c.l.b16 %v1086
        %v1124 = vunpack.c.l.b16 %v1087
        %v1125 = vunpack.c.l.b16 %v1088
        %v1126 = vunpack.c.l.b16 %v1089
        %v1127 = vunpack.c.l.b16 %v1090
        %v1128 = vunpack.c.l.b16 %v1091
        %v1129 = vunpack.c.l.b16 %v1092
        %v1130 = vunpack.c.l.b16 %v1093
        %v1131 = vpack.c.b16 %v1116, %v1115
        %v1132 = vpack.c.b16 %v1118, %v1117
        %v1133 = vpack.c.b16 %v1120, %v1119
        %v1134 = vpack.c.b16 %v1122, %v1121
        %v1135 = vpack.c.b16 %v1124, %v1123
        %v1136 = vpack.c.b16 %v1126, %v1125
        %v1137 = vpack.c.b16 %v1128, %v1127
        %v1138 = vpack.c.b16 %v1130, %v1129
        %1147 = vmatprep.subr.bf16.mxu0 0
        %1148 = vmatpush1.bf16.msra.mxu0 %v1131
        %1149 = vmatprep.subr.bf16.mxu0 0
        %1150 = vmatpush1.bf16.msra.mxu0 %v1132
        %1151 = vmatprep.subr.bf16.mxu0 0
        %1152 = vmatpush1.bf16.msra.mxu0 %v1133
        %1153 = vmatprep.subr.bf16.mxu0 0
        %1154 = vmatpush1.bf16.msra.mxu0 %v1134
        %1155 = vmatprep.subr.bf16.mxu0 0
        %1156 = vmatpush1.bf16.msra.mxu0 %v1135
        %1157 = vmatprep.subr.bf16.mxu0 0
        %1158 = vmatpush1.bf16.msra.mxu0 %v1136
        %1159 = vmatprep.subr.bf16.mxu0 0
        %1160 = vmatpush1.bf16.msra.mxu0 %v1137
        %1161 = vmatprep.subr.bf16.mxu0 0
        %1162 = vmatpush1.bf16.msra.mxu0 %v1138
        %1163 = vmatprep.subr.bf16.mxu0 0
        %1164 = vmatpush1.bf16.msra.mxu0 0
        %1165 = vmatprep.subr.bf16.mxu0 0
        %1166 = vmatpush1.bf16.msra.mxu0 0
        %1167 = vmatprep.subr.bf16.mxu0 0
        %1168 = vmatpush1.bf16.msra.mxu0 0
        %1169 = vmatprep.subr.bf16.mxu0 0
        %1170 = vmatpush1.bf16.msra.mxu0 0
        %1171 = vmatprep.subr.bf16.mxu0 0
        %1172 = vmatpush1.bf16.msra.mxu0 0
        %1173 = vmatprep.subr.bf16.mxu0 0
        %1174 = vmatpush1.bf16.msra.mxu0 0
        %1175 = vmatprep.subr.bf16.mxu0 0
        %1176 = vmatpush1.bf16.msra.mxu0 0
        %1177 = vmatprep.subr.bf16.mxu0 0
        %1178 = vmatpush1.bf16.msra.mxu0 0
        %1179 = vmatprep.mubr.bf16.mxu0 0
        %1180 = vmatmul.mubr.bf16.gmra.mrb[0].mxu0 %v1077
        %v1181 = vpop.f32.mrb[0].mxu0
        %v1182 = vadd.f32 %v1098, %v1181
        %v1183 = vpop.f32.mrb[0].mxu0
        %v1184 = vpop.f32.mrb[0].mxu0
        %v1185 = vadd.f32 %v1098, %v1184
        %v1186 = vpop.f32.mrb[0].mxu0
        %1187 = vdwg.mxu0
        %v1188 = vmax.f32 %v1182, 0.0
        %v1189 = vmax.f32 %v1185, 0.0
        %v1190 = vpack.c.bf16 %v1189, %v1188
        %v1191 = vld [vmem:[#allocation11] sm:$0xf]
        %v1192 = vld [vmem:[#allocation11 + $0x4] sm:$0xf]
        %v1193 = vld [vmem:[#allocation11 + $0x8] sm:$0xf]
        %v1194 = vld [vmem:[#allocation11 + $0xc] sm:$0xf]
        %v1195 = vld [vmem:[#allocation11 + $0x10] sm:$0xf]
        %v1196 = vld [vmem:[#allocation11 + $0x14] sm:$0xf]
        %v1197 = vld [vmem:[#allocation11 + $0x18] sm:$0xf]
        %v1198 = vld [vmem:[#allocation11 + $0x1c] sm:$0xf]
        %v1199 = vld [vmem:[#allocation11 + $0x20] sm:$0xf]
        %v1200 = vld [vmem:[#allocation11 + $0x24] sm:$0xf]
        %v1201 = vld [vmem:[#allocation11 + $0x28] sm:$0xf]
        %v1202 = vld [vmem:[#allocation11 + $0x2c] sm:$0xf]
        %v1203 = vld [vmem:[#allocation11 + $0x30] sm:$0xf]
        %v1204 = vld [vmem:[#allocation11 + $0x34] sm:$0xf]
        %v1205 = vld [vmem:[#allocation11 + $0x38] sm:$0xf]
        %v1206 = vld [vmem:[#allocation11 + $0x3c] sm:$0xf]
        %v1207 = vld [vmem:[%s7 + $0x4] sm:$0x1]
        %v1208 = vlaneseq
        %v1209 = vshrl.u32 %v1208, 7
        %v1210 = vsub.s32 0, %v1209
        %v1211 = vrot.slane %v1207, %v1210
        %v1228 = vunpack.c.l.b16 %v1191
        %v1229 = vunpack.c.l.b16 %v1192
        %v1230 = vunpack.c.l.b16 %v1193
        %v1231 = vunpack.c.l.b16 %v1194
        %v1232 = vunpack.c.l.b16 %v1195
        %v1233 = vunpack.c.l.b16 %v1196
        %v1234 = vunpack.c.l.b16 %v1197
        %v1235 = vunpack.c.l.b16 %v1198
        %v1236 = vunpack.c.l.b16 %v1199
        %v1237 = vunpack.c.l.b16 %v1200
        %v1238 = vunpack.c.l.b16 %v1201
        %v1239 = vunpack.c.l.b16 %v1202
        %v1240 = vunpack.c.l.b16 %v1203
        %v1241 = vunpack.c.l.b16 %v1204
        %v1242 = vunpack.c.l.b16 %v1205
        %v1243 = vunpack.c.l.b16 %v1206
        %v1244 = vpack.c.b16 %v1229, %v1228
        %v1245 = vpack.c.b16 %v1231, %v1230
        %v1246 = vpack.c.b16 %v1233, %v1232
        %v1247 = vpack.c.b16 %v1235, %v1234
        %v1248 = vpack.c.b16 %v1237, %v1236
        %v1249 = vpack.c.b16 %v1239, %v1238
        %v1250 = vpack.c.b16 %v1241, %v1240
        %v1251 = vpack.c.b16 %v1243, %v1242
        %1260 = vmatprep.subr.bf16.mxu0 0
        %1261 = vmatpush1.bf16.msra.mxu0 %v1244
        %1262 = vmatprep.subr.bf16.mxu0 0
        %1263 = vmatpush1.bf16.msra.mxu0 %v1245
        %1264 = vmatprep.subr.bf16.mxu0 0
        %1265 = vmatpush1.bf16.msra.mxu0 %v1246
        %1266 = vmatprep.subr.bf16.mxu0 0
        %1267 = vmatpush1.bf16.msra.mxu0 %v1247
        %1268 = vmatprep.subr.bf16.mxu0 0
        %1269 = vmatpush1.bf16.msra.mxu0 %v1248
        %1270 = vmatprep.subr.bf16.mxu0 0
        %1271 = vmatpush1.bf16.msra.mxu0 %v1249
        %1272 = vmatprep.subr.bf16.mxu0 0
        %1273 = vmatpush1.bf16.msra.mxu0 %v1250
        %1274 = vmatprep.subr.bf16.mxu0 0
        %1275 = vmatpush1.bf16.msra.mxu0 %v1251
        %1276 = vmatprep.subr.bf16.mxu0 0
        %1277 = vmatpush1.bf16.msra.mxu0 0
        %1278 = vmatprep.subr.bf16.mxu0 0
        %1279 = vmatpush1.bf16.msra.mxu0 0
        %1280 = vmatprep.subr.bf16.mxu0 0
        %1281 = vmatpush1.bf16.msra.mxu0 0
        %1282 = vmatprep.subr.bf16.mxu0 0
        %1283 = vmatpush1.bf16.msra.mxu0 0
        %1284 = vmatprep.subr.bf16.mxu0 0
        %1285 = vmatpush1.bf16.msra.mxu0 0
        %1286 = vmatprep.subr.bf16.mxu0 0
        %1287 = vmatpush1.bf16.msra.mxu0 0
        %1288 = vmatprep.subr.bf16.mxu0 0
        %1289 = vmatpush1.bf16.msra.mxu0 0
        %1290 = vmatprep.subr.bf16.mxu0 0
        %1291 = vmatpush1.bf16.msra.mxu0 0
        %1292 = vmatprep.mubr.bf16.mxu0 0
        %1293 = vmatmul.mubr.bf16.gmra.mrb[0].mxu0 %v1190
        %v1294 = vpop.f32.mrb[0].mxu0
        %v1295 = vadd.f32 %v1211, %v1294
        %v1296 = vpop.f32.mrb[0].mxu0
        %v1297 = vpop.f32.mrb[0].mxu0
        %v1298 = vadd.f32 %v1211, %v1297
        %v1299 = vpop.f32.mrb[0].mxu0
        %1300 = vdwg.mxu0
        %v1301 = vunpack.c.l.bf16 %v1077
        %v1302 = vunpack.c.h.bf16 %v1077
        %v1303 = vadd.f32 %v1301, %v1295
        %v1304 = vadd.f32 %v1302, %v1298
        %v1305 = vpack.c.bf16 %v1304, %v1303
        %v1306 = vld [vmem:[#allocation13] sm:$0xf]
        %v1307 = vld [vmem:[#allocation13 + $0x4] sm:$0xf]
        %v1308 = vld [vmem:[#allocation13 + $0x8] sm:$0xf]
        %v1309 = vld [vmem:[#allocation13 + $0xc] sm:$0xf]
        %v1310 = vld [vmem:[#allocation13 + $0x10] sm:$0xf]
        %v1311 = vld [vmem:[#allocation13 + $0x14] sm:$0xf]
        %v1312 = vld [vmem:[#allocation13 + $0x18] sm:$0xf]
        %v1313 = vld [vmem:[#allocation13 + $0x1c] sm:$0xf]
        %v1314 = vld [vmem:[#allocation13 + $0x20] sm:$0xf]
        %v1315 = vld [vmem:[#allocation13 + $0x24] sm:$0xf]
        %v1316 = vld [vmem:[#allocation13 + $0x28] sm:$0xf]
        %v1317 = vld [vmem:[#allocation13 + $0x2c] sm:$0xf]
        %v1318 = vld [vmem:[#allocation13 + $0x30] sm:$0xf]
        %v1319 = vld [vmem:[#allocation13 + $0x34] sm:$0xf]
        %v1320 = vld [vmem:[#allocation13 + $0x38] sm:$0xf]
        %v1321 = vld [vmem:[#allocation13 + $0x3c] sm:$0xf]
        %v1322 = vld [vmem:[%s7 + $0x5] sm:$0x1]
        %v1323 = vlaneseq
        %v1324 = vshrl.u32 %v1323, 7
        %v1325 = vsub.s32 0, %v1324
        %v1326 = vrot.slane %v1322, %v1325
        %v1343 = vunpack.c.l.b16 %v1306
        %v1344 = vunpack.c.l.b16 %v1307
        %v1345 = vunpack.c.l.b16 %v1308
        %v1346 = vunpack.c.l.b16 %v1309
        %v1347 = vunpack.c.l.b16 %v1310
        %v1348 = vunpack.c.l.b16 %v1311
        %v1349 = vunpack.c.l.b16 %v1312
        %v1350 = vunpack.c.l.b16 %v1313
        %v1351 = vunpack.c.l.b16 %v1314
        %v1352 = vunpack.c.l.b16 %v1315
        %v1353 = vunpack.c.l.b16 %v1316
        %v1354 = vunpack.c.l.b16 %v1317
        %v1355 = vunpack.c.l.b16 %v1318
        %v1356 = vunpack.c.l.b16 %v1319
        %v1357 = vunpack.c.l.b16 %v1320
        %v1358 = vunpack.c.l.b16 %v1321
        %v1359 = vpack.c.b16 %v1344, %v1343
        %v1360 = vpack.c.b16 %v1346, %v1345
        %v1361 = vpack.c.b16 %v1348, %v1347
        %v1362 = vpack.c.b16 %v1350, %v1349
        %v1363 = vpack.c.b16 %v1352, %v1351
        %v1364 = vpack.c.b16 %v1354, %v1353
        %v1365 = vpack.c.b16 %v1356, %v1355
        %v1366 = vpack.c.b16 %v1358, %v1357
        %1375 = vmatprep.subr.bf16.mxu0 0
        %1376 = vmatpush1.bf16.msra.mxu0 %v1359
        %1377 = vmatprep.subr.bf16.mxu0 0
        %1378 = vmatpush1.bf16.msra.mxu0 %v1360
        %1379 = vmatprep.subr.bf16.mxu0 0
        %1380 = vmatpush1.bf16.msra.mxu0 %v1361
        %1381 = vmatprep.subr.bf16.mxu0 0
        %1382 = vmatpush1.bf16.msra.mxu0 %v1362
        %1383 = vmatprep.subr.bf16.mxu0 0
        %1384 = vmatpush1.bf16.msra.mxu0 %v1363
        %1385 = vmatprep.subr.bf16.mxu0 0
        %1386 = vmatpush1.bf16.msra.mxu0 %v1364
        %1387 = vmatprep.subr.bf16.mxu0 0
        %1388 = vmatpush1.bf16.msra.mxu0 %v1365
        %1389 = vmatprep.subr.bf16.mxu0 0
        %1390 = vmatpush1.bf16.msra.mxu0 %v1366
        %1391 = vmatprep.subr.bf16.mxu0 0
        %1392 = vmatpush1.bf16.msra.mxu0 0
        %1393 = vmatprep.subr.bf16.mxu0 0
        %1394 = vmatpush1.bf16.msra.mxu0 0
        %1395 = vmatprep.subr.bf16.mxu0 0
        %1396 = vmatpush1.bf16.msra.mxu0 0
        %1397 = vmatprep.subr.bf16.mxu0 0
        %1398 = vmatpush1.bf16.msra.mxu0 0
        %1399 = vmatprep.subr.bf16.mxu0 0
        %1400 = vmatpush1.bf16.msra.mxu0 0
        %1401 = vmatprep.subr.bf16.mxu0 0
        %1402 = vmatpush1.bf16.msra.mxu0 0
        %1403 = vmatprep.subr.bf16.mxu0 0
        %1404 = vmatpush1.bf16.msra.mxu0 0
        %1405 = vmatprep.subr.bf16.mxu0 0
        %1406 = vmatpush1.bf16.msra.mxu0 0
        %1407 = vmatprep.mubr.bf16.mxu0 0
        %1408 = vmatmul.mubr.bf16.gmra.mrb[0].mxu0 %v1305
        %v1409 = vpop.f32.mrb[0].mxu0
        %v1410 = vadd.f32 %v1326, %v1409
        %v1411 = vpop.f32.mrb[0].mxu0
        %v1412 = vpop.f32.mrb[0].mxu0
        %v1413 = vadd.f32 %v1326, %v1412
        %v1414 = vpop.f32.mrb[0].mxu0
        %1415 = vdwg.mxu0
        %v1416 = vmax.f32 %v1410, 0.0
        %v1417 = vmax.f32 %v1413, 0.0
        %v1418 = vpack.c.bf16 %v1417, %v1416
        %v1419 = vld [vmem:[#allocation14] sm:$0xf]
        %v1420 = vld [vmem:[#allocation14 + $0x4] sm:$0xf]
        %v1421 = vld [vmem:[#allocation14 + $0x8] sm:$0xf]
        %v1422 = vld [vmem:[#allocation14 + $0xc] sm:$0xf]
        %v1423 = vld [vmem:[#allocation14 + $0x10] sm:$0xf]
        %v1424 = vld [vmem:[#allocation14 + $0x14] sm:$0xf]
        %v1425 = vld [vmem:[#allocation14 + $0x18] sm:$0xf]
        %v1426 = vld [vmem:[#allocation14 + $0x1c] sm:$0xf]
        %v1427 = vld [vmem:[#allocation14 + $0x20] sm:$0xf]
        %v1428 = vld [vmem:[#allocation14 + $0x24] sm:$0xf]
        %v1429 = vld [vmem:[#allocation14 + $0x28] sm:$0xf]
        %v1430 = vld [vmem:[#allocation14 + $0x2c] sm:$0xf]
        %v1431 = vld [vmem:[#allocation14 + $0x30] sm:$0xf]
        %v1432 = vld [vmem:[#allocation14 + $0x34] sm:$0xf]
        %v1433 = vld [vmem:[#allocation14 + $0x38] sm:$0xf]
        %v1434 = vld [vmem:[#allocation14 + $0x3c] sm:$0xf]
        %v1435 = vld [vmem:[%s14] sm:$0x1]
        %v1436 = vlaneseq
        %v1437 = vshrl.u32 %v1436, 7
        %v1438 = vsub.s32 0, %v1437
        %v1439 = vrot.slane %v1435, %v1438
        %v1456 = vunpack.c.l.b16 %v1419
        %v1457 = vunpack.c.l.b16 %v1420
        %v1458 = vunpack.c.l.b16 %v1421
        %v1459 = vunpack.c.l.b16 %v1422
        %v1460 = vunpack.c.l.b16 %v1423
        %v1461 = vunpack.c.l.b16 %v1424
        %v1462 = vunpack.c.l.b16 %v1425
        %v1463 = vunpack.c.l.b16 %v1426
        %v1464 = vunpack.c.l.b16 %v1427
        %v1465 = vunpack.c.l.b16 %v1428
        %v1466 = vunpack.c.l.b16 %v1429
        %v1467 = vunpack.c.l.b16 %v1430
        %v1468 = vunpack.c.l.b16 %v1431
        %v1469 = vunpack.c.l.b16 %v1432
        %v1470 = vunpack.c.l.b16 %v1433
        %v1471 = vunpack.c.l.b16 %v1434
        %v1472 = vpack.c.b16 %v1457, %v1456
        %v1473 = vpack.c.b16 %v1459, %v1458
        %v1474 = vpack.c.b16 %v1461, %v1460
        %v1475 = vpack.c.b16 %v1463, %v1462
        %v1476 = vpack.c.b16 %v1465, %v1464
        %v1477 = vpack.c.b16 %v1467, %v1466
        %v1478 = vpack.c.b16 %v1469, %v1468
        %v1479 = vpack.c.b16 %v1471, %v1470
        %1488 = vmatprep.subr.bf16.mxu0 0
        %1489 = vmatpush1.bf16.msra.mxu0 %v1472
        %1490 = vmatprep.subr.bf16.mxu0 0
        %1491 = vmatpush1.bf16.msra.mxu0 %v1473
        %1492 = vmatprep.subr.bf16.mxu0 0
        %1493 = vmatpush1.bf16.msra.mxu0 %v1474
        %1494 = vmatprep.subr.bf16.mxu0 0
        %1495 = vmatpush1.bf16.msra.mxu0 %v1475
        %1496 = vmatprep.subr.bf16.mxu0 0
        %1497 = vmatpush1.bf16.msra.mxu0 %v1476
        %1498 = vmatprep.subr.bf16.mxu0 0
        %1499 = vmatpush1.bf16.msra.mxu0 %v1477
        %1500 = vmatprep.subr.bf16.mxu0 0
        %1501 = vmatpush1.bf16.msra.mxu0 %v1478
        %1502 = vmatprep.subr.bf16.mxu0 0
        %1503 = vmatpush1.bf16.msra.mxu0 %v1479
        %1504 = vmatprep.subr.bf16.mxu0 0
        %1505 = vmatpush1.bf16.msra.mxu0 0
        %1506 = vmatprep.subr.bf16.mxu0 0
        %1507 = vmatpush1.bf16.msra.mxu0 0
        %1508 = vmatprep.subr.bf16.mxu0 0
        %1509 = vmatpush1.bf16.msra.mxu0 0
        %1510 = vmatprep.subr.bf16.mxu0 0
        %1511 = vmatpush1.bf16.msra.mxu0 0
        %1512 = vmatprep.subr.bf16.mxu0 0
        %1513 = vmatpush1.bf16.msra.mxu0 0
        %1514 = vmatprep.subr.bf16.mxu0 0
        %1515 = vmatpush1.bf16.msra.mxu0 0
        %1516 = vmatprep.subr.bf16.mxu0 0
        %1517 = vmatpush1.bf16.msra.mxu0 0
        %1518 = vmatprep.subr.bf16.mxu0 0
        %1519 = vmatpush1.bf16.msra.mxu0 0
        %1520 = vmatprep.mubr.bf16.mxu0 0
        %1521 = vmatmul.mubr.bf16.gmra.mrb[0].mxu0 %v1418
        %v1522 = vpop.f32.mrb[0].mxu0
        %v1523 = vadd.f32 %v1439, %v1522
        %v1524 = vpop.f32.mrb[0].mxu0
        %v1525 = vpop.f32.mrb[0].mxu0
        %v1526 = vadd.f32 %v1439, %v1525
        %v1527 = vpop.f32.mrb[0].mxu0
        %1528 = vdwg.mxu0
        %v1529 = vmax.f32 %v1523, 0.0
        %v1530 = vmax.f32 %v1526, 0.0
        %v1531 = vpack.c.bf16 %v1530, %v1529
        %v1532 = vld [vmem:[#allocation16] sm:$0xf]
        %v1533 = vld [vmem:[#allocation16 + $0x4] sm:$0xf]
        %v1534 = vld [vmem:[#allocation16 + $0x8] sm:$0xf]
        %v1535 = vld [vmem:[#allocation16 + $0xc] sm:$0xf]
        %v1536 = vld [vmem:[#allocation16 + $0x10] sm:$0xf]
        %v1537 = vld [vmem:[#allocation16 + $0x14] sm:$0xf]
        %v1538 = vld [vmem:[#allocation16 + $0x18] sm:$0xf]
        %v1539 = vld [vmem:[#allocation16 + $0x1c] sm:$0xf]
        %v1540 = vld [vmem:[#allocation16 + $0x20] sm:$0xf]
        %v1541 = vld [vmem:[#allocation16 + $0x24] sm:$0xf]
        %v1542 = vld [vmem:[#allocation16 + $0x28] sm:$0xf]
        %v1543 = vld [vmem:[#allocation16 + $0x2c] sm:$0xf]
        %v1544 = vld [vmem:[#allocation16 + $0x30] sm:$0xf]
        %v1545 = vld [vmem:[#allocation16 + $0x34] sm:$0xf]
        %v1546 = vld [vmem:[#allocation16 + $0x38] sm:$0xf]
        %v1547 = vld [vmem:[#allocation16 + $0x3c] sm:$0xf]
        %v1548 = vld [vmem:[%s14 + $0x1] sm:$0x1]
        %v1549 = vlaneseq
        %v1550 = vshrl.u32 %v1549, 7
        %v1551 = vsub.s32 0, %v1550
        %v1552 = vrot.slane %v1548, %v1551
        %v1569 = vunpack.c.l.b16 %v1532
        %v1570 = vunpack.c.l.b16 %v1533
        %v1571 = vunpack.c.l.b16 %v1534
        %v1572 = vunpack.c.l.b16 %v1535
        %v1573 = vunpack.c.l.b16 %v1536
        %v1574 = vunpack.c.l.b16 %v1537
        %v1575 = vunpack.c.l.b16 %v1538
        %v1576 = vunpack.c.l.b16 %v1539
        %v1577 = vunpack.c.l.b16 %v1540
        %v1578 = vunpack.c.l.b16 %v1541
        %v1579 = vunpack.c.l.b16 %v1542
        %v1580 = vunpack.c.l.b16 %v1543
        %v1581 = vunpack.c.l.b16 %v1544
        %v1582 = vunpack.c.l.b16 %v1545
        %v1583 = vunpack.c.l.b16 %v1546
        %v1584 = vunpack.c.l.b16 %v1547
        %v1585 = vpack.c.b16 %v1570, %v1569
        %v1586 = vpack.c.b16 %v1572, %v1571
        %v1587 = vpack.c.b16 %v1574, %v1573
        %v1588 = vpack.c.b16 %v1576, %v1575
        %v1589 = vpack.c.b16 %v1578, %v1577
        %v1590 = vpack.c.b16 %v1580, %v1579
        %v1591 = vpack.c.b16 %v1582, %v1581
        %v1592 = vpack.c.b16 %v1584, %v1583
        %1601 = vmatprep.subr.bf16.mxu0 0
        %1602 = vmatpush1.bf16.msra.mxu0 %v1585
        %1603 = vmatprep.subr.bf16.mxu0 0
        %1604 = vmatpush1.bf16.msra.mxu0 %v1586
        %1605 = vmatprep.subr.bf16.mxu0 0
        %1606 = vmatpush1.bf16.msra.mxu0 %v1587
        %1607 = vmatprep.subr.bf16.mxu0 0
        %1608 = vmatpush1.bf16.msra.mxu0 %v1588
        %1609 = vmatprep.subr.bf16.mxu0 0
        %1610 = vmatpush1.bf16.msra.mxu0 %v1589
        %1611 = vmatprep.subr.bf16.mxu0 0
        %1612 = vmatpush1.bf16.msra.mxu0 %v1590
        %1613 = vmatprep.subr.bf16.mxu0 0
        %1614 = vmatpush1.bf16.msra.mxu0 %v1591
        %1615 = vmatprep.subr.bf16.mxu0 0
        %1616 = vmatpush1.bf16.msra.mxu0 %v1592
        %1617 = vmatprep.subr.bf16.mxu0 0
        %1618 = vmatpush1.bf16.msra.mxu0 0
        %1619 = vmatprep.subr.bf16.mxu0 0
        %1620 = vmatpush1.bf16.msra.mxu0 0
        %1621 = vmatprep.subr.bf16.mxu0 0
        %1622 = vmatpush1.bf16.msra.mxu0 0
        %1623 = vmatprep.subr.bf16.mxu0 0
        %1624 = vmatpush1.bf16.msra.mxu0 0
        %1625 = vmatprep.subr.bf16.mxu0 0
        %1626 = vmatpush1.bf16.msra.mxu0 0
        %1627 = vmatprep.subr.bf16.mxu0 0
        %1628 = vmatpush1.bf16.msra.mxu0 0
        %1629 = vmatprep.subr.bf16.mxu0 0
        %1630 = vmatpush1.bf16.msra.mxu0 0
        %1631 = vmatprep.subr.bf16.mxu0 0
        %1632 = vmatpush1.bf16.msra.mxu0 0
        %1633 = vmatprep.mubr.bf16.mxu0 0
        %1634 = vmatmul.mubr.bf16.gmra.mrb[0].mxu0 %v1531
        %v1635 = vpop.f32.mrb[0].mxu0
        %v1636 = vadd.f32 %v1552, %v1635
        %v1637 = vpop.f32.mrb[0].mxu0
        %v1638 = vpop.f32.mrb[0].mxu0
        %v1639 = vadd.f32 %v1552, %v1638
        %v1640 = vpop.f32.mrb[0].mxu0
        %1641 = vdwg.mxu0
        %v1642 = vmax.f32 %v1636, 0.0
        %v1643 = vmax.f32 %v1639, 0.0
        %v1644 = vpack.c.bf16 %v1643, %v1642
        %v1645 = vld [vmem:[#allocation17] sm:$0xf]
        %v1646 = vld [vmem:[#allocation17 + $0x4] sm:$0xf]
        %v1647 = vld [vmem:[#allocation17 + $0x8] sm:$0xf]
        %v1648 = vld [vmem:[#allocation17 + $0xc] sm:$0xf]
        %v1649 = vld [vmem:[#allocation17 + $0x10] sm:$0xf]
        %v1650 = vld [vmem:[#allocation17 + $0x14] sm:$0xf]
        %v1651 = vld [vmem:[#allocation17 + $0x18] sm:$0xf]
        %v1652 = vld [vmem:[#allocation17 + $0x1c] sm:$0xf]
        %v1653 = vld [vmem:[#allocation17 + $0x20] sm:$0xf]
        %v1654 = vld [vmem:[#allocation17 + $0x24] sm:$0xf]
        %v1655 = vld [vmem:[#allocation17 + $0x28] sm:$0xf]
        %v1656 = vld [vmem:[#allocation17 + $0x2c] sm:$0xf]
        %v1657 = vld [vmem:[#allocation17 + $0x30] sm:$0xf]
        %v1658 = vld [vmem:[#allocation17 + $0x34] sm:$0xf]
        %v1659 = vld [vmem:[#allocation17 + $0x38] sm:$0xf]
        %v1660 = vld [vmem:[#allocation17 + $0x3c] sm:$0xf]
        %v1661 = vld [vmem:[%s14 + $0x2] sm:$0x1]
        %v1662 = vlaneseq
        %v1663 = vshrl.u32 %v1662, 7
        %v1664 = vsub.s32 0, %v1663
        %v1665 = vrot.slane %v1661, %v1664
        %v1682 = vunpack.c.l.b16 %v1645
        %v1683 = vunpack.c.l.b16 %v1646
        %v1684 = vunpack.c.l.b16 %v1647
        %v1685 = vunpack.c.l.b16 %v1648
        %v1686 = vunpack.c.l.b16 %v1649
        %v1687 = vunpack.c.l.b16 %v1650
        %v1688 = vunpack.c.l.b16 %v1651
        %v1689 = vunpack.c.l.b16 %v1652
        %v1690 = vunpack.c.l.b16 %v1653
        %v1691 = vunpack.c.l.b16 %v1654
        %v1692 = vunpack.c.l.b16 %v1655
        %v1693 = vunpack.c.l.b16 %v1656
        %v1694 = vunpack.c.l.b16 %v1657
        %v1695 = vunpack.c.l.b16 %v1658
        %v1696 = vunpack.c.l.b16 %v1659
        %v1697 = vunpack.c.l.b16 %v1660
        %v1698 = vpack.c.b16 %v1683, %v1682
        %v1699 = vpack.c.b16 %v1685, %v1684
        %v1700 = vpack.c.b16 %v1687, %v1686
        %v1701 = vpack.c.b16 %v1689, %v1688
        %v1702 = vpack.c.b16 %v1691, %v1690
        %v1703 = vpack.c.b16 %v1693, %v1692
        %v1704 = vpack.c.b16 %v1695, %v1694
        %v1705 = vpack.c.b16 %v1697, %v1696
        %1714 = vmatprep.subr.bf16.mxu0 0
        %1715 = vmatpush1.bf16.msra.mxu0 %v1698
        %1716 = vmatprep.subr.bf16.mxu0 0
        %1717 = vmatpush1.bf16.msra.mxu0 %v1699
        %1718 = vmatprep.subr.bf16.mxu0 0
        %1719 = vmatpush1.bf16.msra.mxu0 %v1700
        %1720 = vmatprep.subr.bf16.mxu0 0
        %1721 = vmatpush1.bf16.msra.mxu0 %v1701
        %1722 = vmatprep.subr.bf16.mxu0 0
        %1723 = vmatpush1.bf16.msra.mxu0 %v1702
        %1724 = vmatprep.subr.bf16.mxu0 0
        %1725 = vmatpush1.bf16.msra.mxu0 %v1703
        %1726 = vmatprep.subr.bf16.mxu0 0
        %1727 = vmatpush1.bf16.msra.mxu0 %v1704
        %1728 = vmatprep.subr.bf16.mxu0 0
        %1729 = vmatpush1.bf16.msra.mxu0 %v1705
        %1730 = vmatprep.subr.bf16.mxu0 0
        %1731 = vmatpush1.bf16.msra.mxu0 0
        %1732 = vmatprep.subr.bf16.mxu0 0
        %1733 = vmatpush1.bf16.msra.mxu0 0
        %1734 = vmatprep.subr.bf16.mxu0 0
        %1735 = vmatpush1.bf16.msra.mxu0 0
        %1736 = vmatprep.subr.bf16.mxu0 0
        %1737 = vmatpush1.bf16.msra.mxu0 0
        %1738 = vmatprep.subr.bf16.mxu0 0
        %1739 = vmatpush1.bf16.msra.mxu0 0
        %1740 = vmatprep.subr.bf16.mxu0 0
        %1741 = vmatpush1.bf16.msra.mxu0 0
        %1742 = vmatprep.subr.bf16.mxu0 0
        %1743 = vmatpush1.bf16.msra.mxu0 0
        %1744 = vmatprep.subr.bf16.mxu0 0
        %1745 = vmatpush1.bf16.msra.mxu0 0
        %1746 = vmatprep.mubr.bf16.mxu0 0
        %1747 = vmatmul.mubr.bf16.gmra.mrb[0].mxu0 %v1644
        %v1748 = vpop.f32.mrb[0].mxu0
        %v1749 = vadd.f32 %v1665, %v1748
        %v1750 = vpop.f32.mrb[0].mxu0
        %v1751 = vpop.f32.mrb[0].mxu0
        %v1752 = vadd.f32 %v1665, %v1751
        %v1753 = vpop.f32.mrb[0].mxu0
        %1754 = vdwg.mxu0
        %v1755 = vunpack.c.l.bf16 %v1531
        %v1756 = vunpack.c.h.bf16 %v1531
        %v1757 = vadd.f32 %v1755, %v1749
        %v1758 = vadd.f32 %v1756, %v1752
        %v1759 = vpack.c.bf16 %v1758, %v1757
        %v1760 = vld [vmem:[#allocation19] sm:$0xf]
        %v1761 = vld [vmem:[#allocation19 + $0x4] sm:$0xf]
        %v1762 = vld [vmem:[#allocation19 + $0x8] sm:$0xf]
        %v1763 = vld [vmem:[#allocation19 + $0xc] sm:$0xf]
        %v1764 = vld [vmem:[#allocation19 + $0x10] sm:$0xf]
        %v1765 = vld [vmem:[#allocation19 + $0x14] sm:$0xf]
        %v1766 = vld [vmem:[#allocation19 + $0x18] sm:$0xf]
        %v1767 = vld [vmem:[#allocation19 + $0x1c] sm:$0xf]
        %v1768 = vld [vmem:[#allocation19 + $0x20] sm:$0xf]
        %v1769 = vld [vmem:[#allocation19 + $0x24] sm:$0xf]
        %v1770 = vld [vmem:[#allocation19 + $0x28] sm:$0xf]
        %v1771 = vld [vmem:[#allocation19 + $0x2c] sm:$0xf]
        %v1772 = vld [vmem:[#allocation19 + $0x30] sm:$0xf]
        %v1773 = vld [vmem:[#allocation19 + $0x34] sm:$0xf]
        %v1774 = vld [vmem:[#allocation19 + $0x38] sm:$0xf]
        %v1775 = vld [vmem:[#allocation19 + $0x3c] sm:$0xf]
        %v1776 = vld [vmem:[%s14 + $0x3] sm:$0x1]
        %v1777 = vlaneseq
        %v1778 = vshrl.u32 %v1777, 7
        %v1779 = vsub.s32 0, %v1778
        %v1780 = vrot.slane %v1776, %v1779
        %v1797 = vunpack.c.l.b16 %v1760
        %v1798 = vunpack.c.l.b16 %v1761
        %v1799 = vunpack.c.l.b16 %v1762
        %v1800 = vunpack.c.l.b16 %v1763
        %v1801 = vunpack.c.l.b16 %v1764
        %v1802 = vunpack.c.l.b16 %v1765
        %v1803 = vunpack.c.l.b16 %v1766
        %v1804 = vunpack.c.l.b16 %v1767
        %v1805 = vunpack.c.l.b16 %v1768
        %v1806 = vunpack.c.l.b16 %v1769
        %v1807 = vunpack.c.l.b16 %v1770
        %v1808 = vunpack.c.l.b16 %v1771
        %v1809 = vunpack.c.l.b16 %v1772
        %v1810 = vunpack.c.l.b16 %v1773
        %v1811 = vunpack.c.l.b16 %v1774
        %v1812 = vunpack.c.l.b16 %v1775
        %v1813 = vpack.c.b16 %v1798, %v1797
        %v1814 = vpack.c.b16 %v1800, %v1799
        %v1815 = vpack.c.b16 %v1802, %v1801
        %v1816 = vpack.c.b16 %v1804, %v1803
        %v1817 = vpack.c.b16 %v1806, %v1805
        %v1818 = vpack.c.b16 %v1808, %v1807
        %v1819 = vpack.c.b16 %v1810, %v1809
        %v1820 = vpack.c.b16 %v1812, %v1811
        %1829 = vmatprep.subr.bf16.mxu0 0
        %1830 = vmatpush1.bf16.msra.mxu0 %v1813
        %1831 = vmatprep.subr.bf16.mxu0 0
        %1832 = vmatpush1.bf16.msra.mxu0 %v1814
        %1833 = vmatprep.subr.bf16.mxu0 0
        %1834 = vmatpush1.bf16.msra.mxu0 %v1815
        %1835 = vmatprep.subr.bf16.mxu0 0
        %1836 = vmatpush1.bf16.msra.mxu0 %v1816
        %1837 = vmatprep.subr.bf16.mxu0 0
        %1838 = vmatpush1.bf16.msra.mxu0 %v1817
        %1839 = vmatprep.subr.bf16.mxu0 0
        %1840 = vmatpush1.bf16.msra.mxu0 %v1818
        %1841 = vmatprep.subr.bf16.mxu0 0
        %1842 = vmatpush1.bf16.msra.mxu0 %v1819
        %1843 = vmatprep.subr.bf16.mxu0 0
        %1844 = vmatpush1.bf16.msra.mxu0 %v1820
        %1845 = vmatprep.subr.bf16.mxu0 0
        %1846 = vmatpush1.bf16.msra.mxu0 0
        %1847 = vmatprep.subr.bf16.mxu0 0
        %1848 = vmatpush1.bf16.msra.mxu0 0
        %1849 = vmatprep.subr.bf16.mxu0 0
        %1850 = vmatpush1.bf16.msra.mxu0 0
        %1851 = vmatprep.subr.bf16.mxu0 0
        %1852 = vmatpush1.bf16.msra.mxu0 0
        %1853 = vmatprep.subr.bf16.mxu0 0
        %1854 = vmatpush1.bf16.msra.mxu0 0
        %1855 = vmatprep.subr.bf16.mxu0 0
        %1856 = vmatpush1.bf16.msra.mxu0 0
        %1857 = vmatprep.subr.bf16.mxu0 0
        %1858 = vmatpush1.bf16.msra.mxu0 0
        %1859 = vmatprep.subr.bf16.mxu0 0
        %1860 = vmatpush1.bf16.msra.mxu0 0
        %1861 = vmatprep.mubr.bf16.mxu0 0
        %1862 = vmatmul.mubr.bf16.gmra.mrb[0].mxu0 %v1759
        %v1863 = vpop.f32.mrb[0].mxu0
        %v1864 = vadd.f32 %v1780, %v1863
        %v1865 = vpop.f32.mrb[0].mxu0
        %v1866 = vpop.f32.mrb[0].mxu0
        %v1867 = vadd.f32 %v1780, %v1866
        %v1868 = vpop.f32.mrb[0].mxu0
        %1869 = vdwg.mxu0
        %v1870 = vmax.f32 %v1864, 0.0
        %v1871 = vmax.f32 %v1867, 0.0
        %v1872 = vpack.c.bf16 %v1871, %v1870
        %v1873 = vld [vmem:[#allocation20] sm:$0xf]
        %v1874 = vld [vmem:[#allocation20 + $0x4] sm:$0xf]
        %v1875 = vld [vmem:[#allocation20 + $0x8] sm:$0xf]
        %v1876 = vld [vmem:[#allocation20 + $0xc] sm:$0xf]
        %v1877 = vld [vmem:[#allocation20 + $0x10] sm:$0xf]
        %v1878 = vld [vmem:[#allocation20 + $0x14] sm:$0xf]
        %v1879 = vld [vmem:[#allocation20 + $0x18] sm:$0xf]
        %v1880 = vld [vmem:[#allocation20 + $0x1c] sm:$0xf]
        %v1881 = vld [vmem:[#allocation20 + $0x20] sm:$0xf]
        %v1882 = vld [vmem:[#allocation20 + $0x24] sm:$0xf]
        %v1883 = vld [vmem:[#allocation20 + $0x28] sm:$0xf]
        %v1884 = vld [vmem:[#allocation20 + $0x2c] sm:$0xf]
        %v1885 = vld [vmem:[#allocation20 + $0x30] sm:$0xf]
        %v1886 = vld [vmem:[#allocation20 + $0x34] sm:$0xf]
        %v1887 = vld [vmem:[#allocation20 + $0x38] sm:$0xf]
        %v1888 = vld [vmem:[#allocation20 + $0x3c] sm:$0xf]
        %v1889 = vld [vmem:[%s14 + $0x4] sm:$0x1]
        %v1890 = vlaneseq
        %v1891 = vshrl.u32 %v1890, 7
        %v1892 = vsub.s32 0, %v1891
        %v1893 = vrot.slane %v1889, %v1892
        %v1910 = vunpack.c.l.b16 %v1873
        %v1911 = vunpack.c.l.b16 %v1874
        %v1912 = vunpack.c.l.b16 %v1875
        %v1913 = vunpack.c.l.b16 %v1876
        %v1914 = vunpack.c.l.b16 %v1877
        %v1915 = vunpack.c.l.b16 %v1878
        %v1916 = vunpack.c.l.b16 %v1879
        %v1917 = vunpack.c.l.b16 %v1880
        %v1918 = vunpack.c.l.b16 %v1881
        %v1919 = vunpack.c.l.b16 %v1882
        %v1920 = vunpack.c.l.b16 %v1883
        %v1921 = vunpack.c.l.b16 %v1884
        %v1922 = vunpack.c.l.b16 %v1885
        %v1923 = vunpack.c.l.b16 %v1886
        %v1924 = vunpack.c.l.b16 %v1887
        %v1925 = vunpack.c.l.b16 %v1888
        %v1926 = vpack.c.b16 %v1911, %v1910
        %v1927 = vpack.c.b16 %v1913, %v1912
        %v1928 = vpack.c.b16 %v1915, %v1914
        %v1929 = vpack.c.b16 %v1917, %v1916
        %v1930 = vpack.c.b16 %v1919, %v1918
        %v1931 = vpack.c.b16 %v1921, %v1920
        %v1932 = vpack.c.b16 %v1923, %v1922
        %v1933 = vpack.c.b16 %v1925, %v1924
        %1942 = vmatprep.subr.bf16.mxu0 0
        %1943 = vmatpush1.bf16.msra.mxu0 %v1926
        %1944 = vmatprep.subr.bf16.mxu0 0
        %1945 = vmatpush1.bf16.msra.mxu0 %v1927
        %1946 = vmatprep.subr.bf16.mxu0 0
        %1947 = vmatpush1.bf16.msra.mxu0 %v1928
        %1948 = vmatprep.subr.bf16.mxu0 0
        %1949 = vmatpush1.bf16.msra.mxu0 %v1929
        %1950 = vmatprep.subr.bf16.mxu0 0
        %1951 = vmatpush1.bf16.msra.mxu0 %v1930
        %1952 = vmatprep.subr.bf16.mxu0 0
        %1953 = vmatpush1.bf16.msra.mxu0 %v1931
        %1954 = vmatprep.subr.bf16.mxu0 0
        %1955 = vmatpush1.bf16.msra.mxu0 %v1932
        %1956 = vmatprep.subr.bf16.mxu0 0
        %1957 = vmatpush1.bf16.msra.mxu0 %v1933
        %1958 = vmatprep.subr.bf16.mxu0 0
        %1959 = vmatpush1.bf16.msra.mxu0 0
        %1960 = vmatprep.subr.bf16.mxu0 0
        %1961 = vmatpush1.bf16.msra.mxu0 0
        %1962 = vmatprep.subr.bf16.mxu0 0
        %1963 = vmatpush1.bf16.msra.mxu0 0
        %1964 = vmatprep.subr.bf16.mxu0 0
        %1965 = vmatpush1.bf16.msra.mxu0 0
        %1966 = vmatprep.subr.bf16.mxu0 0
        %1967 = vmatpush1.bf16.msra.mxu0 0
        %1968 = vmatprep.subr.bf16.mxu0 0
        %1969 = vmatpush1.bf16.msra.mxu0 0
        %1970 = vmatprep.subr.bf16.mxu0 0
        %1971 = vmatpush1.bf16.msra.mxu0 0
        %1972 = vmatprep.subr.bf16.mxu0 0
        %1973 = vmatpush1.bf16.msra.mxu0 0
        %1974 = vmatprep.mubr.bf16.mxu0 0
        %1975 = vmatmul.mubr.bf16.gmra.mrb[0].mxu0 %v1872
        %v1976 = vpop.f32.mrb[0].mxu0
        %v1977 = vadd.f32 %v1893, %v1976
        %v1978 = vpop.f32.mrb[0].mxu0
        %v1979 = vpop.f32.mrb[0].mxu0
        %v1980 = vadd.f32 %v1893, %v1979
        %v1981 = vpop.f32.mrb[0].mxu0
        %1982 = vdwg.mxu0
        %v1983 = vunpack.c.l.bf16 %v1759
        %v1984 = vunpack.c.h.bf16 %v1759
        %v1985 = vadd.f32 %v1983, %v1977
        %v1986 = vadd.f32 %v1984, %v1980
        %v1987 = vpack.c.bf16 %v1986, %v1985
        %v1988 = vld [vmem:[#allocation22] sm:$0xf]
        %v1989 = vld [vmem:[#allocation22 + $0x4] sm:$0xf]
        %v1990 = vld [vmem:[#allocation22 + $0x8] sm:$0xf]
        %v1991 = vld [vmem:[#allocation22 + $0xc] sm:$0xf]
        %v1992 = vld [vmem:[#allocation22 + $0x10] sm:$0xf]
        %v1993 = vld [vmem:[#allocation22 + $0x14] sm:$0xf]
        %v1994 = vld [vmem:[#allocation22 + $0x18] sm:$0xf]
        %v1995 = vld [vmem:[#allocation22 + $0x1c] sm:$0xf]
        %v1996 = vld [vmem:[#allocation22 + $0x20] sm:$0xf]
        %v1997 = vld [vmem:[#allocation22 + $0x24] sm:$0xf]
        %v1998 = vld [vmem:[#allocation22 + $0x28] sm:$0xf]
        %v1999 = vld [vmem:[#allocation22 + $0x2c] sm:$0xf]
        %v2000 = vld [vmem:[#allocation22 + $0x30] sm:$0xf]
        %v2001 = vld [vmem:[#allocation22 + $0x34] sm:$0xf]
        %v2002 = vld [vmem:[#allocation22 + $0x38] sm:$0xf]
        %v2003 = vld [vmem:[#allocation22 + $0x3c] sm:$0xf]
        %v2004 = vld [vmem:[%s14 + $0x5] sm:$0x1]
        %v2005 = vlaneseq
        %v2006 = vshrl.u32 %v2005, 7
        %v2007 = vsub.s32 0, %v2006
        %v2008 = vrot.slane %v2004, %v2007
        %v2025 = vunpack.c.l.b16 %v1988
        %v2026 = vunpack.c.l.b16 %v1989
        %v2027 = vunpack.c.l.b16 %v1990
        %v2028 = vunpack.c.l.b16 %v1991
        %v2029 = vunpack.c.l.b16 %v1992
        %v2030 = vunpack.c.l.b16 %v1993
        %v2031 = vunpack.c.l.b16 %v1994
        %v2032 = vunpack.c.l.b16 %v1995
        %v2033 = vunpack.c.l.b16 %v1996
        %v2034 = vunpack.c.l.b16 %v1997
        %v2035 = vunpack.c.l.b16 %v1998
        %v2036 = vunpack.c.l.b16 %v1999
        %v2037 = vunpack.c.l.b16 %v2000
        %v2038 = vunpack.c.l.b16 %v2001
        %v2039 = vunpack.c.l.b16 %v2002
        %v2040 = vunpack.c.l.b16 %v2003
        %v2041 = vpack.c.b16 %v2026, %v2025
        %v2042 = vpack.c.b16 %v2028, %v2027
        %v2043 = vpack.c.b16 %v2030, %v2029
        %v2044 = vpack.c.b16 %v2032, %v2031
        %v2045 = vpack.c.b16 %v2034, %v2033
        %v2046 = vpack.c.b16 %v2036, %v2035
        %v2047 = vpack.c.b16 %v2038, %v2037
        %v2048 = vpack.c.b16 %v2040, %v2039
        %2057 = vmatprep.subr.bf16.mxu0 0
        %2058 = vmatpush1.bf16.msra.mxu0 %v2041
        %2059 = vmatprep.subr.bf16.mxu0 0
        %2060 = vmatpush1.bf16.msra.mxu0 %v2042
        %2061 = vmatprep.subr.bf16.mxu0 0
        %2062 = vmatpush1.bf16.msra.mxu0 %v2043
        %2063 = vmatprep.subr.bf16.mxu0 0
        %2064 = vmatpush1.bf16.msra.mxu0 %v2044
        %2065 = vmatprep.subr.bf16.mxu0 0
        %2066 = vmatpush1.bf16.msra.mxu0 %v2045
        %2067 = vmatprep.subr.bf16.mxu0 0
        %2068 = vmatpush1.bf16.msra.mxu0 %v2046
        %2069 = vmatprep.subr.bf16.mxu0 0
        %2070 = vmatpush1.bf16.msra.mxu0 %v2047
        %2071 = vmatprep.subr.bf16.mxu0 0
        %2072 = vmatpush1.bf16.msra.mxu0 %v2048
        %2073 = vmatprep.subr.bf16.mxu0 0
        %2074 = vmatpush1.bf16.msra.mxu0 0
        %2075 = vmatprep.subr.bf16.mxu0 0
        %2076 = vmatpush1.bf16.msra.mxu0 0
        %2077 = vmatprep.subr.bf16.mxu0 0
        %2078 = vmatpush1.bf16.msra.mxu0 0
        %2079 = vmatprep.subr.bf16.mxu0 0
        %2080 = vmatpush1.bf16.msra.mxu0 0
        %2081 = vmatprep.subr.bf16.mxu0 0
        %2082 = vmatpush1.bf16.msra.mxu0 0
        %2083 = vmatprep.subr.bf16.mxu0 0
        %2084 = vmatpush1.bf16.msra.mxu0 0
        %2085 = vmatprep.subr.bf16.mxu0 0
        %2086 = vmatpush1.bf16.msra.mxu0 0
        %2087 = vmatprep.subr.bf16.mxu0 0
        %2088 = vmatpush1.bf16.msra.mxu0 0
        %2089 = vmatprep.mubr.bf16.mxu0 0
        %2090 = vmatmul.mubr.bf16.gmra.mrb[0].mxu0 %v1987
        %v2091 = vpop.f32.mrb[0].mxu0
        %v2092 = vadd.f32 %v2008, %v2091
        %v2093 = vpop.f32.mrb[0].mxu0
        %v2094 = vpop.f32.mrb[0].mxu0
        %v2095 = vadd.f32 %v2008, %v2094
        %v2096 = vpop.f32.mrb[0].mxu0
        %2097 = vdwg.mxu0
        %v2098 = vmax.f32 %v2092, 0.0
        %v2099 = vmax.f32 %v2095, 0.0
        %v2100 = vpack.c.bf16 %v2099, %v2098
        %v2102 = vunpack.c.l.b16 %v1418
        %v2103 = vunpack.c.h.b16 %v1418
        %v2104 = vpack.c.b16 %v2102, %v2102
        %v2105 = vpack.c.b16 %v2103, %v2103
        %2108 = vst [vmem:[%s717] sm:$0xf] %v2104
        %2109 = vst [vmem:[%s717 + $0x4] sm:$0xf] %v2105
        %v2111 = vunpack.c.l.b16 %v2100
        %v2112 = vunpack.c.h.b16 %v2100
        %v2113 = vpack.c.b16 %v2111, %v2111
        %v2114 = vpack.c.b16 %v2112, %v2112
        %2117 = vst [vmem:[%s724] sm:$0xf] %v2113
        %2118 = vst [vmem:[%s724 + $0x4] sm:$0xf] %v2114
        %s2119 = sand.u32 %s371, 1
        %s2120 = scalar_lea.sflag [#allocation4], %s2119
        %s2121 = sand.u32 %s371, 1
        %s2122 = smul.addr %s2121, 8
        %s2123 = scalar_lea.vmem [#allocation23], %s2122
        %s2124 = sand.u32 %s397, 1
        %s2125 = scalar_lea.sflag [#allocation25], %s2124
        %s2126 = sand.u32 %s397, 1
        %s2127 = smul.addr %s2126, 8
        %s2128 = scalar_lea.vmem [#allocation24], %s2127
        // Predicated region
        $region133: #{tpu_custom_call.1} parent=79 // pred_check
          %p2129 = pneg %p381
        $region134: #{tpu_custom_call.1} parent=79 // pred_check_branch
          %2131 = sbr.rel (%p2129) target = $region136
        $region135: #{tpu_custom_call.1} parent=79 // pred_region
          %s2132 = smul.u32 2, %s43
          %s2134 = ssub.s32 128, 128
          %2135 = vsyncadd %s2120, %s2134
          %s2136 = smul.addr %s2132, 64
          %s2137 = scalar_lea.hbm %s15, %s2136
          %s2138 = sshll.u32 %s2123, 4
          %s2139 = int_to_ptr.vmem [resolvable:$true] %s2138
          %2144 = dma.vmem_to_hbm [thread:$0]  %s2139, 128, %s2137, %s2120, 64, 64, 4
        $region136: #{tpu_custom_call.1} parent=79 // pred_fallthru
          _
        // Predicated region
        $region137: #{tpu_custom_call.1} parent=79 // pred_check
          %p2145 = pneg %p407
        $region138: #{tpu_custom_call.1} parent=79 // pred_check_branch
          %2147 = sbr.rel (%p2145) target = $region140
        $region139: #{tpu_custom_call.1} parent=79 // pred_region
          %s2148 = smul.u32 2, %s43
          %s2150 = ssub.s32 128, 128
          %2151 = vsyncadd %s2125, %s2150
          %s2152 = smul.addr %s2148, 64
          %s2153 = scalar_lea.hbm %s16, %s2152
          %s2154 = sshll.u32 %s2128, 4
          %s2155 = int_to_ptr.vmem [resolvable:$true] %s2154
          %2160 = dma.vmem_to_hbm [thread:$0]  %s2155, 128, %s2153, %s2125, 64, 64, 4
        $region140: #{tpu_custom_call.1} parent=79 // pred_fallthru
          _
      $region80: #{tpu_custom_call.1} parent=5 // pred_fallthru
        _
      %p2161 = scmp.le.s32.totalorder 2, %s38
      // Predicated region
      $region141: #{tpu_custom_call.1} parent=5 // pred_check
        %p2162 = pneg %p2161
      $region142: #{tpu_custom_call.1} parent=5 // pred_check_branch
        %2164 = sbr.rel (%p2162) target = $region144
      $region143: #{tpu_custom_call.1} parent=5 // pred_region
        %s2165 = ssub.s32 %s38, 2
        // Predicated region
        $region145: #{tpu_custom_call.1} parent=143 // pred_check
          %p2166 = pneg %p387
        $region146: #{tpu_custom_call.1} parent=143 // pred_check_branch
          %2168 = sbr.rel (%p2166) target = $region148
        $region147: #{tpu_custom_call.1} parent=143 // pred_region
          %s2169 = sand.u32 %s372, 1
          %s2170 = scalar_lea.sflag [#allocation4], %s2169
          %s2171 = sand.u32 %s372, 1
          %s2172 = smul.addr %s2171, 8
          %s2173 = scalar_lea.vmem [#allocation23], %s2172
          %2174 = dma.done %s2170, 128
        $region148: #{tpu_custom_call.1} parent=143 // pred_fallthru
          _
        // Predicated region
        $region149: #{tpu_custom_call.1} parent=143 // pred_check
          %p2175 = pneg %p413
        $region150: #{tpu_custom_call.1} parent=143 // pred_check_branch
          %2177 = sbr.rel (%p2175) target = $region152
        $region151: #{tpu_custom_call.1} parent=143 // pred_region
          %s2178 = sand.u32 %s398, 1
          %s2179 = scalar_lea.sflag [#allocation25], %s2178
          %s2180 = sand.u32 %s398, 1
          %s2181 = smul.addr %s2180, 8
          %s2182 = scalar_lea.vmem [#allocation24], %s2181
          %2183 = dma.done %s2179, 128
        $region152: #{tpu_custom_call.1} parent=143 // pred_fallthru
          _
      $region144: #{tpu_custom_call.1} parent=5 // pred_fallthru
        _
    $region6: #{tpu_custom_call.1} parent=1 // loop_footer
      %s42 = sadd.s32 1, %s38
    $region7: #{tpu_custom_call.1} parent=1 // loop_footer_branch
      %37 = sbr.rel target = $region3
    $region8: #{tpu_custom_call.1} parent=1 // loop_exit
      _
    %2184 = vsyncpa [#allocation3], 1
    %s2185 = scalar_lea.sflag [#allocation3], 1
    %2186 = vsyncpa %s2185, 1
    %2187 = vsyncpa [#allocation6], 1
    %2188 = vsyncpa [#allocation9], 1
    %2189 = vsyncpa [#allocation12], 1
    %2190 = vsyncpa [#allocation15], 1
    %2191 = vsyncpa [#allocation18], 1
    %2192 = vsyncpa [#allocation21], 1
    %2193 = vsyncpa [#allocation4], 1
    %s2194 = scalar_lea.sflag [#allocation4], 1
    %2195 = vsyncpa %s2194, 1
    %2196 = vsyncpa [#allocation25], 1
    %s2197 = scalar_lea.sflag [#allocation25], 1
    %2198 = vsyncpa %s2197, 1

</llo_original>
